<compile_context>
chip_gen: v6e
topology: v6e:2x2x1
jax: 0.10.0
libtpu: 0.0.40
codegen_flags: <defaults>
</compile_context>

<pallas_src>
import functools

import jax
import jax.numpy as jnp
from jax.experimental import pallas as pl
from jax.experimental.pallas import tpu as pltpu

PAD_ID = 0        # token_to_id['<pad>']
ALPHA = 1.5

B, T, H, V = 2, 8, 32, 256
N = B * T

_NEG_LARGE = -1e30      # tail-column logit mask (exp underflows to exactly 0)
_NEG_INIT = -3e38       # finite running-max init (avoids inf-inf NaN paths)


def _cdiv(a, b):
    return -(-a // b)


def _round_up(x, m):
    return ((x + m - 1) // m) * m


def _sublane_pack(dtype):
    return {4: 8, 2: 16, 1: 32}.get(jnp.dtype(dtype).itemsize, 8)


def _geometry(n, v, h_dtype, tile_n, tile_v):
    """Static tile geometry.  Row axis is the megacore-'parallel' axis of the
    forward kernel, so keep >=2 (preferably even) row tiles when possible."""
    pack = _sublane_pack(h_dtype)
    tile_v = _round_up(min(int(tile_v), v), 128)
    v_pad = _round_up(v, tile_v)

    tile_n = _round_up(max(1, min(int(tile_n), n)), pack)
    row_tiles = _cdiv(n, tile_n)
    if row_tiles < 2 and n > pack:
        tile_n = max(pack, _round_up(_cdiv(n, 2), pack))
        row_tiles = _cdiv(n, tile_n)
    if row_tiles > 1 and row_tiles % 2 == 1:
        t2 = max(pack, _round_up(_cdiv(n, row_tiles + 1), pack))
        if _cdiv(n, t2) % 2 == 0:
            tile_n, row_tiles = t2, _cdiv(n, t2)
    n_pad = row_tiles * tile_n
    return tile_n, tile_v, n_pad, v_pad, row_tiles, v_pad // tile_v


def _vmem_limit_bytes(tile_n, tile_v, h_dim, in_itemsize):
    """Double-buffered streamed inputs + in-kernel f32 tile temps + scratch,
    capped per generation (v7x has 64 MiB physical VMEM, v5e/v6e 128 MiB)."""
    dbuf = 2 * (tile_n * h_dim * in_itemsize          # h tile
                + h_dim * tile_v * in_itemsize        # W_tok tile
                + tile_n * (4 + 4 + 4))               # tgt / lse / tiny outs
    temps = 3 * tile_n * tile_v * 4                   # f32 logits / exp / D
    scratch = max(3 * tile_n, h_dim * tile_v) * 4     # fwd scratch / bwd acc
    want = dbuf + temps + scratch + (4 << 20)
    try:
        cap = pltpu.get_tpu_info().vmem_capacity_bytes
    except Exception:                                 # unknown target / interpret
        cap = 64 << 20
    hard_cap = (40 << 20) if cap <= (64 << 20) else (96 << 20)
    return int(min(max(want, 16 << 20), hard_cap))


# -----------------------------------------------------------------------------
# Forward kernel: fused (h @ W_tok) + online logsumexp + target-logit gather.
# grid = (row_tiles [parallel], vocab_tiles [arbitrary]).
# Outputs per-row LSE and target logit (residuals reused by the backward pass).
# -----------------------------------------------------------------------------
def _fused_ce_fwd_kernel(h_ref, wtok_ref, tgt_ref, lse_ref, tl_ref,
                         m_scr, s_scr, tl_scr, *, v_total, mask_tail):
    j = pl.program_id(1)
    nv = pl.num_programs(1)

    @pl.when(j == 0)
    def _init():
        m_scr[...] = jnp.full_like(m_scr, _NEG_INIT)
        s_scr[...] = jnp.zeros_like(s_scr)
        tl_scr[...] = jnp.zeros_like(tl_scr)

    # (tile_n, tile_v) logits block straight off the MXU; never hits HBM.
    logits = jnp.dot(h_ref[...], wtok_ref[...],
                     preferred_element_type=jnp.float32)
    tn, tv = logits.shape
    col = jax.lax.broadcasted_iota(jnp.int32, (tn, tv), 1)   # local column id

    if mask_tail:
        # Ragged V: zero-padded W_tok columns give logit 0 — push them to a
        # huge negative so they don't perturb the logsumexp.  Static flag: this
        # select is not even traced when V divides tile_v.
        logits = jnp.where(col < (v_total - j * tv), logits, _NEG_LARGE)

    # online logsumexp across vocab tiles
    local_max = jnp.max(logits, axis=-1, keepdims=True)
    m_old = m_scr[...]
    m_new = jnp.maximum(m_old, local_max)
    s_scr[...] = (s_scr[...] * jnp.exp(m_old - m_new)
                  + jnp.sum(jnp.exp(logits - m_new), axis=-1, keepdims=True))
    m_scr[...] = m_new

    # target-logit gather: compare local column ids against (tgt - j*tile_v);
    # (tile_n,1) subtract instead of a full-tile iota add (VALU-bound path).
    tgt_local = tgt_ref[...] - j * tv
    tl_scr[...] += jnp.sum(jnp.where(col == tgt_local, logits, 0.0),
                           axis=-1, keepdims=True)

    @pl.when(j == nv - 1)
    def _finalize():
        lse_ref[...] = m_scr[...] + jnp.log(s_scr[...])
        tl_ref[...] = tl_scr[...]


def fused_ce_forward(h_flat, w_tok, tgt_flat, *, tile_n=256, tile_v=4096):
    """Returns per-row (lse, target_logit) for CE with ignore_index handled
    outside (O(N) epilogue); all O(N*V*H) work runs in the Pallas kernel."""
    n, h_dim = h_flat.shape
    v = w_tok.shape[-1]
    tile_n, tile_v, n_pad, v_pad, row_tiles, vocab_tiles = _geometry(
        n, v, h_flat.dtype, tile_n, tile_v)

    if n_pad != n:
        h_flat = jnp.pad(h_flat, ((0, n_pad - n), (0, 0)))
        tgt_flat = jnp.pad(tgt_flat, (0, n_pad - n), constant_values=PAD_ID)
    if v_pad != v:
        w_tok = jnp.pad(w_tok, ((0, 0), (0, v_pad - v)))   # cheap H x pad

    tgt2 = tgt_flat.reshape(-1, 1).astype(jnp.int32)
    isz = jnp.dtype(h_flat.dtype).itemsize

    kernel = functools.partial(_fused_ce_fwd_kernel, v_total=v,
                               mask_tail=(v_pad != v))
    lse, tgt_logit = pl.pallas_call(
        kernel,
        out_shape=(jax.ShapeDtypeStruct((n_pad, 1), jnp.float32),
                   jax.ShapeDtypeStruct((n_pad, 1), jnp.float32)),
        grid_spec=pltpu.PrefetchScalarGridSpec(
            num_scalar_prefetch=0,
            grid=(row_tiles, vocab_tiles),
            in_specs=[
                pl.BlockSpec((tile_n, h_dim), lambda i, j: (i, 0)),
                pl.BlockSpec((h_dim, tile_v), lambda i, j: (0, j)),
                pl.BlockSpec((tile_n, 1), lambda i, j: (i, 0)),
            ],
            out_specs=[pl.BlockSpec((tile_n, 1), lambda i, j: (i, 0)),
                       pl.BlockSpec((tile_n, 1), lambda i, j: (i, 0))],
            scratch_shapes=[pltpu.VMEM((tile_n, 1), jnp.float32)] * 3,
        ),
        compiler_params=pltpu.CompilerParams(
            dimension_semantics=("parallel", "arbitrary"),
            vmem_limit_bytes=_vmem_limit_bytes(tile_n, tile_v, h_dim, isz)),
        cost_estimate=pl.CostEstimate(
            flops=2 * n_pad * v_pad * h_dim,
            transcendentals=n_pad * v_pad,
            bytes_accessed=(n_pad * h_dim * isz
                            + row_tiles * h_dim * v_pad * isz
                            + n_pad * 12)),
    )(h_flat, w_tok, tgt2)
    return lse[:n, 0], tgt_logit[:n, 0]


# -----------------------------------------------------------------------------
# Backward kernel: streaming || dL_cls / dW_tok ||^2 reusing the saved LSE.
# grid = (vocab_tiles [parallel], row_tiles [arbitrary]); per-vocab-tile
# (H, tile_v) accumulator, squared-column partials written lane-dense (1, tile_v).
# -----------------------------------------------------------------------------
def _fused_ce_bwd_kernel(h_ref, wtok_ref, tgt_ref, lse_ref, out_ref, acc_ref,
                         *, v_total, mask_tail):
    j = pl.program_id(0)
    i = pl.program_id(1)
    ni = pl.num_programs(1)

    @pl.when(i == 0)
    def _init():
        acc_ref[...] = jnp.zeros_like(acc_ref)

    logits = jnp.dot(h_ref[...], wtok_ref[...],
                     preferred_element_type=jnp.float32)
    tn, tv = logits.shape
    col = jax.lax.broadcasted_iota(jnp.int32, (tn, tv), 1)

    p = jnp.exp(logits - lse_ref[...])                    # softmax via saved LSE
    tgt = tgt_ref[...]
    one_hot = (col == (tgt - j * tv)).astype(jnp.float32)
    valid = (tgt != PAD_ID).astype(jnp.float32)
    d = (p - one_hot) * valid                             # unscaled dL/dlogits
    if mask_tail:
        d = jnp.where(col < (v_total - j * tv), d, 0.0)

    # dW_tok block = h^T @ d  (contract the row dimension on the MXU)
    acc_ref[...] += jax.lax.dot_general(
        h_ref[...].astype(jnp.float32), d,
        dimension_numbers=(((0,), (0,)), ((), ())),
        preferred_element_type=jnp.float32)

    @pl.when(i == ni - 1)
    def _finalize():
        out_ref[...] = jnp.sum(acc_ref[...] * acc_ref[...], axis=0,
                               keepdims=True)


def fused_ce_wtok_grad_sqnorm(h_flat, w_tok, tgt_flat, lse, *, tile_n=256,
                              tile_v=4096):
    """||h^T ((softmax - onehot) * valid)||_F^2 without materializing the
    gradient in HBM (per-vocab-tile squared-column partials, summed outside)."""
    n, h_dim = h_flat.shape
    v = w_tok.shape[-1]
    tile_n, tile_v, n_pad, v_pad, row_tiles, vocab_tiles = _geometry(
        n, v, h_flat.dtype, tile_n, tile_v)

    if n_pad != n:
        h_flat = jnp.pad(h_flat, ((0, n_pad - n), (0, 0)))
        tgt_flat = jnp.pad(tgt_flat, (0, n_pad - n), constant_values=PAD_ID)
        lse = jnp.pad(lse, (0, n_pad - n))
    if v_pad != v:
        w_tok = jnp.pad(w_tok, ((0, 0), (0, v_pad - v)))

    tgt2 = tgt_flat.reshape(-1, 1).astype(jnp.int32)
    lse2 = lse.reshape(-1, 1).astype(jnp.float32)
    isz = jnp.dtype(h_flat.dtype).itemsize

    kernel = functools.partial(_fused_ce_bwd_kernel, v_total=v,
                               mask_tail=(v_pad != v))
    colsq = pl.pallas_call(
        kernel,
        out_shape=jax.ShapeDtypeStruct((1, v_pad), jnp.float32),
        grid_spec=pltpu.PrefetchScalarGridSpec(
            num_scalar_prefetch=0,
            grid=(vocab_tiles, row_tiles),
            in_specs=[
                pl.BlockSpec((tile_n, h_dim), lambda j, i: (i, 0)),
                pl.BlockSpec((h_dim, tile_v), lambda j, i: (0, j)),
                pl.BlockSpec((tile_n, 1), lambda j, i: (i, 0)),
                pl.BlockSpec((tile_n, 1), lambda j, i: (i, 0)),
            ],
            out_specs=pl.BlockSpec((1, tile_v), lambda j, i: (0, j)),
            scratch_shapes=[pltpu.VMEM((h_dim, tile_v), jnp.float32)],
        ),
        compiler_params=pltpu.CompilerParams(
            dimension_semantics=("parallel", "arbitrary"),
            vmem_limit_bytes=_vmem_limit_bytes(tile_n, tile_v, h_dim, isz)),
        cost_estimate=pl.CostEstimate(
            flops=4 * n_pad * v_pad * h_dim,
            transcendentals=n_pad * v_pad,
            bytes_accessed=(vocab_tiles * n_pad * (h_dim * isz + 8)
                            + h_dim * v_pad * isz + v_pad * 4)),
    )(h_flat, w_tok, tgt2, lse2)
    return jnp.sum(colsq)


# -----------------------------------------------------------------------------
# GradNormLoss.forward
# -----------------------------------------------------------------------------
@functools.partial(jax.jit, static_argnames=("tile_n", "tile_v"))
def gradnorm_forward(w, params, h, token_targets, value_targets, value_mask,
                     L_0=None, *, tile_n=256, tile_v=4096):
    w_tok, w_val = params["W_tok"], params["W_val"]
    h_flat = h.reshape(-1, h.shape[-1])
    tgt_flat = token_targets.reshape(-1).astype(jnp.int32)

    # --- classification loss: fused streaming Pallas kernel -------------------
    lse, tgt_logit = fused_ce_forward(h_flat, w_tok, tgt_flat,
                                      tile_n=tile_n, tile_v=tile_v)
    valid = (tgt_flat != PAD_ID).astype(jnp.float32)
    ce_cnt = jnp.sum(valid)
    classification_loss = jnp.where(
        ce_cnt > 0,
        jnp.sum((lse - tgt_logit) * valid) / jnp.maximum(ce_cnt, 1.0), 0.0)

    # --- regression loss: O(N) epilogue (value head is a single dot) ----------
    value_preds = jnp.einsum("nh,h->n", h_flat.astype(jnp.float32),
                             w_val.astype(jnp.float32))
    vm = value_mask.reshape(-1).astype(jnp.float32)
    diff = (value_preds - value_targets.reshape(-1).astype(jnp.float32)) * vm
    m_cnt = jnp.sum(vm)
    regression_loss = jnp.where(
        m_cnt > 0, jnp.sum(diff * diff) / jnp.maximum(m_cnt, 1.0), 0.0)

    L_t = jnp.stack([classification_loss, regression_loss])
    if L_0 is None:                       # torch stores self.L_0 on first call
        L_0 = jax.lax.stop_gradient(L_t)

    weighted_losses = L_t * w
    total_loss = jnp.sum(weighted_losses)

    # --- per-task gradient norms (torch.autograd.grad w.r.t. the head params) -
    # cls gradient lives only in W_tok: ||h^T (softmax-onehot)*valid||_F / cnt,
    # computed by the streaming Pallas backward pass from the saved LSE.
    sq = fused_ce_wtok_grad_sqnorm(h_flat, w_tok, tgt_flat, lse,
                                   tile_n=tile_n, tile_v=tile_v)
    g_cls = jnp.where(ce_cnt > 0,
                      w[0] * jnp.sqrt(sq) / jnp.maximum(ce_cnt, 1.0), 0.0)
    # reg gradient lives only in W_val: (2/cnt) * h^T diff  (O(N*H), plain XLA)
    g_vec = jnp.einsum("nh,n->h", h_flat.astype(jnp.float32), diff)
    g_reg = jnp.where(m_cnt > 0,
                      w[1] * 2.0 * jnp.linalg.norm(g_vec)
                      / jnp.maximum(m_cnt, 1.0), 0.0)
    grads = jnp.stack([g_cls, g_reg])

    G_avg = jax.lax.stop_gradient(jnp.mean(grads))
    L_hat = jax.lax.stop_gradient(L_t / L_0)
    r_t = L_hat / jnp.mean(L_hat)
    target_grads = G_avg * r_t ** ALPHA
    grad_norm_loss = jnp.mean(jnp.abs(grads - target_grads))   # nn.L1Loss

    total_loss = total_loss + grad_norm_loss
    return total_loss, classification_loss, regression_loss, L_t, grads


# -----------------------------------------------------------------------------
# Plain-JAX reference (losses + autodiff grad norms) for correctness checking.
# -----------------------------------------------------------------------------
def _ref_task_losses(params, h, token_targets, value_targets, value_mask):
    logits = jnp.einsum("bth,hv->btv", h.astype(jnp.float32),
                        params["W_tok"].astype(jnp.float32))
    logits = logits.reshape(-1, logits.shape[-1])
    tgt = token_targets.reshape(-1)
    lse = jax.scipy.special.logsumexp(logits, axis=-1)
    tl = jnp.take_along_axis(logits, tgt[:, None], axis=-1)[:, 0]
    valid = (tgt != PAD_ID).astype(jnp.float32)
    cls = jnp.sum((lse - tl) * valid) / jnp.maximum(jnp.sum(valid), 1.0)
    preds = jnp.einsum("bth,h->bt", h.astype(jnp.float32),
                       params["W_val"].astype(jnp.float32))
    m = value_mask.astype(jnp.float32)
    reg = jnp.sum(((preds - value_targets) * m) ** 2) / jnp.maximum(jnp.sum(m), 1.0)
    return cls, reg


def _tree_norm(tree):
    return jnp.sqrt(sum(jnp.sum(x.astype(jnp.float32) ** 2)
                        for x in jax.tree_util.tree_leaves(tree)))


# -----------------------------------------------------------------------------
if __name__ == "__main__":
    key = jax.random.PRNGKey(0)
    k1, k2, k3, k4, k5, k6 = jax.random.split(key, 6)

    params = {
        "W_tok": 0.02 * jax.random.normal(k1, (H, V), dtype=jnp.float32),
        "W_val": 0.02 * jax.random.normal(k2, (H,), dtype=jnp.float32),
    }
    w = jnp.ones((2,), dtype=jnp.float32)   # self.w = nn.Parameter(torch.ones(2))

    h = jax.random.normal(k3, (B, T, H), dtype=jnp.float32)
    token_targets = jax.random.randint(k4, (B, T), 0, V, dtype=jnp.int32)
    token_targets = token_targets.at[:, -1].set(PAD_ID)   # exercise ignore_index
    value_targets = jax.random.normal(k5, (B, T), dtype=jnp.float32)
    value_mask = jax.random.bernoulli(k6, 0.5, (B, T))

    # Tiny tiles so the demo shapes (N=16, V=256) exercise a (2 x 2) forward
    # grid and a (2 x 2) backward grid (row-parallel + vocab reduction).
    total, cls, reg, L_t, grads = gradnorm_forward(
        w, params, h, token_targets, value_targets, value_mask,
        tile_n=8, tile_v=128)
    jax.block_until_ready((total, cls, reg, L_t, grads))

    # Second step with threaded L_0 state (torch stores self.L_0 at first call).
    total2, _, _, _, _ = gradnorm_forward(
        w, params, h, token_targets, value_targets, value_mask, L_t,
        tile_n=8, tile_v=128)
    jax.block_until_ready(total2)

    # --- losses vs plain-JAX reference ---------------------------------------
    cls_ref, reg_ref = _ref_task_losses(params, h, token_targets,
                                        value_targets, value_mask)
    assert jnp.allclose(cls, cls_ref, rtol=1e-4, atol=1e-5), (cls, cls_ref)
    assert jnp.allclose(reg, reg_ref, rtol=1e-4, atol=1e-5), (reg, reg_ref)

    # --- per-task grad norms vs jax.grad autodiff reference -------------------
    g_cls_ref = _tree_norm(jax.grad(
        lambda p: w[0] * _ref_task_losses(p, h, token_targets, value_targets,
                                          value_mask)[0])(params))
    g_reg_ref = _tree_norm(jax.grad(
        lambda p: w[1] * _ref_task_losses(p, h, token_targets, value_targets,
                                          value_mask)[1])(params))
    assert jnp.allclose(grads[0], g_cls_ref, rtol=1e-3, atol=1e-5), (grads[0], g_cls_ref)
    assert jnp.allclose(grads[1], g_reg_ref, rtol=1e-3, atol=1e-5), (grads[1], g_reg_ref)

    # --- bf16 streaming path: h / W_tok streamed as bf16, f32 MXU accumulate --
    params_bf16 = {"W_tok": params["W_tok"].astype(jnp.bfloat16),
                   "W_val": params["W_val"]}
    tot_b, cls_b, reg_b, _, _ = gradnorm_forward(
        w, params_bf16, h.astype(jnp.bfloat16), token_targets, value_targets,
        value_mask, tile_n=16, tile_v=128)
    jax.block_until_ready(tot_b)
    assert jnp.allclose(cls_b, cls_ref, rtol=3e-2, atol=3e-2), (cls_b, cls_ref)

    assert jnp.isfinite(total) and jnp.isfinite(total2) and jnp.isfinite(tot_b)
    print("KERNEL_OK")
</pallas_src>

<mosaic_0001>
module attributes {stable_mosaic.version = 11 : i64} {
  func.func @_fused_ce_fwd_kernel(%arg0: i32, %arg1: i32, %arg2: memref<8x32xf32, #tpu.memory_space<vmem>>, %arg3: memref<32x128xf32, #tpu.memory_space<vmem>>, %arg4: memref<8x1xi32, #tpu.memory_space<vmem>>, %arg5: memref<8x1xf32, #tpu.memory_space<vmem>>, %arg6: memref<8x1xf32, #tpu.memory_space<vmem>>, %arg7: memref<8x1xf32, #tpu.memory_space<vmem>>, %arg8: memref<8x1xf32, #tpu.memory_space<vmem>>, %arg9: memref<8x1xf32, #tpu.memory_space<vmem>>) attributes {dimension_semantics = [#tpu.dimension_semantics<parallel>, #tpu.dimension_semantics<arbitrary>], iteration_bounds = array<i64: 2, 2>, scalar_prefetch = 0 : i64, scratch_operands = 3 : i64, tpu.core_type = #tpu.core_type<tc>, window_params = [{transform_indices = @transform_0, window_bounds = array<i64: 8, 32>}, {transform_indices = @transform_1, window_bounds = array<i64: 32, 128>}, {transform_indices = @transform_2, window_bounds = array<i64: 8, 1>}, {transform_indices = @transform_3, window_bounds = array<i64: 8, 1>}, {transform_indices = @transform_4, window_bounds = array<i64: 8, 1>}]} {
    %c0_i32 = arith.constant 0 : i32
    %0 = arith.cmpi eq, %arg1, %c0_i32 : i32
    %1 = arith.extui %0 : i1 to i32
    %c0_i32_0 = arith.constant 0 : i32
    %2 = arith.cmpi ne, %1, %c0_i32_0 : i32
    scf.if %2 {
      %cst_23 = arith.constant -3.000000e+38 : f32
      %39 = vector.broadcast %cst_23 : f32 to vector<8x1xf32>
      %c0_24 = arith.constant 0 : index
      %c0_25 = arith.constant 0 : index
      %40 = vector.load %arg7[%c0_24, %c0_25] : memref<8x1xf32, #tpu.memory_space<vmem>>, vector<8x1xf32>
      tpu.vector_store %arg7[%c0_24, %c0_25], %39 {strides = array<i32>} : memref<8x1xf32, #tpu.memory_space<vmem>>, vector<8x1xf32>,
      %cst_26 = arith.constant 0.000000e+00 : f32
      %41 = vector.broadcast %cst_26 : f32 to vector<8x1xf32>
      %c0_27 = arith.constant 0 : index
      %c0_28 = arith.constant 0 : index
      %42 = vector.load %arg8[%c0_27, %c0_28] : memref<8x1xf32, #tpu.memory_space<vmem>>, vector<8x1xf32>
      tpu.vector_store %arg8[%c0_27, %c0_28], %41 {strides = array<i32>} : memref<8x1xf32, #tpu.memory_space<vmem>>, vector<8x1xf32>,
      %cst_29 = arith.constant 0.000000e+00 : f32
      %43 = vector.broadcast %cst_29 : f32 to vector<8x1xf32>
      %c0_30 = arith.constant 0 : index
      %c0_31 = arith.constant 0 : index
      %44 = vector.load %arg9[%c0_30, %c0_31] : memref<8x1xf32, #tpu.memory_space<vmem>>, vector<8x1xf32>
      tpu.vector_store %arg9[%c0_30, %c0_31], %43 {strides = array<i32>} : memref<8x1xf32, #tpu.memory_space<vmem>>, vector<8x1xf32>,
    } else {
    }
    %c0 = arith.constant 0 : index
    %c0_1 = arith.constant 0 : index
    %3 = vector.load %arg2[%c0, %c0_1] : memref<8x32xf32, #tpu.memory_space<vmem>>, vector<8x32xf32>
    %c0_2 = arith.constant 0 : index
    %c0_3 = arith.constant 0 : index
    %4 = vector.load %arg3[%c0_2, %c0_3] : memref<32x128xf32, #tpu.memory_space<vmem>>, vector<32x128xf32>
    %cst = arith.constant dense<0.000000e+00> : vector<8x128xf32>
    %5 = tpu.matmul %3, %4, %cst {dimension_numbers = #tpu.dot_dimension_numbers<[1], [0], [0], [1], [0, 0, 1, 1], [], []>} : vector<8x32xf32>, vector<32x128xf32>, vector<8x128xf32> -> vector<8x128xf32>
    %6 = tpu.iota {dimensions = array<i32: 1>} : vector<8x128xi32>
    %cst_4 = arith.constant dense<0xFF800000> : vector<8xf32>
    %7 = vector.multi_reduction <maximumf>, %5, %cst_4 [1] : vector<8x128xf32> to vector<8xf32>
    %8 = vector.shape_cast %7 : vector<8xf32> to vector<8x1xf32>
    %c0_5 = arith.constant 0 : index
    %c0_6 = arith.constant 0 : index
    %9 = vector.load %arg7[%c0_5, %c0_6] : memref<8x1xf32, #tpu.memory_space<vmem>>, vector<8x1xf32>
    %10 = arith.maximumf %9, %8 : vector<8x1xf32>
    %c0_7 = arith.constant 0 : index
    %c0_8 = arith.constant 0 : index
    %11 = vector.load %arg8[%c0_7, %c0_8] : memref<8x1xf32, #tpu.memory_space<vmem>>, vector<8x1xf32>
    %12 = arith.subf %9, %10 : vector<8x1xf32>
    %13 = math.exp %12 : vector<8x1xf32>
    %14 = arith.mulf %11, %13 : vector<8x1xf32>
    %15 = vector.broadcast %10 : vector<8x1xf32> to vector<8x128xf32>
    %16 = arith.subf %5, %15 : vector<8x128xf32>
    %17 = math.exp %16 : vector<8x128xf32>
    %cst_9 = arith.constant dense<0.000000e+00> : vector<8xf32>
    %18 = vector.multi_reduction <add>, %17, %cst_9 [1] : vector<8x128xf32> to vector<8xf32>
    %19 = vector.shape_cast %18 : vector<8xf32> to vector<8x1xf32>
    %20 = arith.addf %14, %19 : vector<8x1xf32>
    %c0_10 = arith.constant 0 : index
    %c0_11 = arith.constant 0 : index
    %21 = vector.load %arg8[%c0_10, %c0_11] : memref<8x1xf32, #tpu.memory_space<vmem>>, vector<8x1xf32>
    tpu.vector_store %arg8[%c0_10, %c0_11], %20 {strides = array<i32>} : memref<8x1xf32, #tpu.memory_space<vmem>>, vector<8x1xf32>,
    %c0_12 = arith.constant 0 : index
    %c0_13 = arith.constant 0 : index
    %22 = vector.load %arg7[%c0_12, %c0_13] : memref<8x1xf32, #tpu.memory_space<vmem>>, vector<8x1xf32>
    tpu.vector_store %arg7[%c0_12, %c0_13], %10 {strides = array<i32>} : memref<8x1xf32, #tpu.memory_space<vmem>>, vector<8x1xf32>,
    %c0_14 = arith.constant 0 : index
    %c0_15 = arith.constant 0 : index
    %23 = vector.load %arg4[%c0_14, %c0_15] : memref<8x1xi32, #tpu.memory_space<vmem>>, vector<8x1xi32>
    %c128_i32 = arith.constant 128 : i32
    %24 = arith.muli %arg1, %c128_i32 : i32
    %25 = vector.broadcast %24 : i32 to vector<8x1xi32>
    %26 = arith.subi %23, %25 : vector<8x1xi32>
    %c0_16 = arith.constant 0 : index
    %c0_17 = arith.constant 0 : index
    %27 = vector.load %arg9[%c0_16, %c0_17] : memref<8x1xf32, #tpu.memory_space<vmem>>, vector<8x1xf32>
    %28 = vector.broadcast %26 : vector<8x1xi32> to vector<8x128xi32>
    %29 = arith.cmpi eq, %6, %28 : vector<8x128xi32>
    %cst_18 = arith.constant 0.000000e+00 : f32
    %30 = vector.broadcast %cst_18 : f32 to vector<8x128xf32>
    %31 = arith.select %29, %5, %30 : vector<8x128xi1>, vector<8x128xf32>
    %cst_19 = arith.constant dense<0.000000e+00> : vector<8xf32>
    %32 = vector.multi_reduction <add>, %31, %cst_19 [1] : vector<8x128xf32> to vector<8xf32>
    %33 = vector.shape_cast %32 : vector<8xf32> to vector<8x1xf32>
    %34 = arith.addf %27, %33 : vector<8x1xf32>
    %c0_20 = arith.constant 0 : index
    %c0_21 = arith.constant 0 : index
    %35 = vector.load %arg9[%c0_20, %c0_21] : memref<8x1xf32, #tpu.memory_space<vmem>>, vector<8x1xf32>
    tpu.vector_store %arg9[%c0_20, %c0_21], %34 {strides = array<i32>} : memref<8x1xf32, #tpu.memory_space<vmem>>, vector<8x1xf32>,
    %c1_i32 = arith.constant 1 : i32
    %36 = arith.cmpi eq, %arg1, %c1_i32 : i32
    %37 = arith.extui %36 : i1 to i32
    %c0_i32_22 = arith.constant 0 : i32
    %38 = arith.cmpi ne, %37, %c0_i32_22 : i32
    scf.if %38 {
      %c0_23 = arith.constant 0 : index
      %c0_24 = arith.constant 0 : index
      %39 = vector.load %arg7[%c0_23, %c0_24] : memref<8x1xf32, #tpu.memory_space<vmem>>, vector<8x1xf32>
      %c0_25 = arith.constant 0 : index
      %c0_26 = arith.constant 0 : index
      %40 = vector.load %arg8[%c0_25, %c0_26] : memref<8x1xf32, #tpu.memory_space<vmem>>, vector<8x1xf32>
      %41 = math.log %40 : vector<8x1xf32>
      %42 = arith.addf %39, %41 : vector<8x1xf32>
      %c0_27 = arith.constant 0 : index
      %c0_28 = arith.constant 0 : index
      %43 = vector.load %arg5[%c0_27, %c0_28] : memref<8x1xf32, #tpu.memory_space<vmem>>, vector<8x1xf32>
      tpu.vector_store %arg5[%c0_27, %c0_28], %42 {strides = array<i32>} : memref<8x1xf32, #tpu.memory_space<vmem>>, vector<8x1xf32>,
      %c0_29 = arith.constant 0 : index
      %c0_30 = arith.constant 0 : index
      %44 = vector.load %arg9[%c0_29, %c0_30] : memref<8x1xf32, #tpu.memory_space<vmem>>, vector<8x1xf32>
      %c0_31 = arith.constant 0 : index
      %c0_32 = arith.constant 0 : index
      %45 = vector.load %arg6[%c0_31, %c0_32] : memref<8x1xf32, #tpu.memory_space<vmem>>, vector<8x1xf32>
      tpu.vector_store %arg6[%c0_31, %c0_32], %44 {strides = array<i32>} : memref<8x1xf32, #tpu.memory_space<vmem>>, vector<8x1xf32>,
    } else {
    }
    return
  }
  func.func @transform_0(%arg0: i32, %arg1: i32) -> (i32, i32) {
    %c0_i32 = arith.constant 0 : i32
    %c0_i32_0 = arith.constant 0 : i32
    return %arg0, %c0_i32 : i32, i32
  }
  func.func @transform_1(%arg0: i32, %arg1: i32) -> (i32, i32) {
    %c0_i32 = arith.constant 0 : i32
    %c0_i32_0 = arith.constant 0 : i32
    return %c0_i32, %arg1 : i32, i32
  }
  func.func @transform_2(%arg0: i32, %arg1: i32) -> (i32, i32) {
    %c0_i32 = arith.constant 0 : i32
    %c0_i32_0 = arith.constant 0 : i32
    return %arg0, %c0_i32 : i32, i32
  }
  func.func @transform_3(%arg0: i32, %arg1: i32) -> (i32, i32) {
    %c0_i32 = arith.constant 0 : i32
    %c0_i32_0 = arith.constant 0 : i32
    return %arg0, %c0_i32 : i32, i32
  }
  func.func @transform_4(%arg0: i32, %arg1: i32) -> (i32, i32) {
    %c0_i32 = arith.constant 0 : i32
    %c0_i32_0 = arith.constant 0 : i32
    return %arg0, %c0_i32 : i32, i32
  }
}

module attributes {stable_mosaic.version = 11 : i64} {
  func.func @_fused_ce_bwd_kernel(%arg0: i32, %arg1: i32, %arg2: memref<8x32xf32, #tpu.memory_space<vmem>>, %arg3: memref<32x128xf32, #tpu.memory_space<vmem>>, %arg4: memref<8x1xi32, #tpu.memory_space<vmem>>, %arg5: memref<8x1xf32, #tpu.memory_space<vmem>>, %arg6: memref<1x128xf32, #tpu.memory_space<vmem>>, %arg7: memref<32x128xf32, #tpu.memory_space<vmem>>) attributes {dimension_semantics = [#tpu.dimension_semantics<parallel>, #tpu.dimension_semantics<arbitrary>], iteration_bounds = array<i64: 2, 2>, scalar_prefetch = 0 : i64, scratch_operands = 1 : i64, tpu.core_type = #tpu.core_type<tc>, window_params = [{transform_indices = @transform_0, window_bounds = array<i64: 8, 32>}, {transform_indices = @transform_1, window_bounds = array<i64: 32, 128>}, {transform_indices = @transform_2, window_bounds = array<i64: 8, 1>}, {transform_indices = @transform_3, window_bounds = array<i64: 8, 1>}, {transform_indices = @transform_4, window_bounds = array<i64: 1, 128>}]} {
    %c0_i32 = arith.constant 0 : i32
    %0 = arith.cmpi eq, %arg1, %c0_i32 : i32
    %1 = arith.extui %0 : i1 to i32
    %c0_i32_0 = arith.constant 0 : i32
    %2 = arith.cmpi ne, %1, %c0_i32_0 : i32
    scf.if %2 {
      %cst_17 = arith.constant 0.000000e+00 : f32
      %34 = vector.broadcast %cst_17 : f32 to vector<32x128xf32>
      %c0_18 = arith.constant 0 : index
      %c0_19 = arith.constant 0 : index
      %35 = vector.load %arg7[%c0_18, %c0_19] : memref<32x128xf32, #tpu.memory_space<vmem>>, vector<32x128xf32>
      tpu.vector_store %arg7[%c0_18, %c0_19], %34 {strides = array<i32>} : memref<32x128xf32, #tpu.memory_space<vmem>>, vector<32x128xf32>,
    } else {
    }
    %c0 = arith.constant 0 : index
    %c0_1 = arith.constant 0 : index
    %3 = vector.load %arg2[%c0, %c0_1] : memref<8x32xf32, #tpu.memory_space<vmem>>, vector<8x32xf32>
    %c0_2 = arith.constant 0 : index
    %c0_3 = arith.constant 0 : index
    %4 = vector.load %arg3[%c0_2, %c0_3] : memref<32x128xf32, #tpu.memory_space<vmem>>, vector<32x128xf32>
    %cst = arith.constant dense<0.000000e+00> : vector<8x128xf32>
    %5 = tpu.matmul %3, %4, %cst {dimension_numbers = #tpu.dot_dimension_numbers<[1], [0], [0], [1], [0, 0, 1, 1], [], []>} : vector<8x32xf32>, vector<32x128xf32>, vector<8x128xf32> -> vector<8x128xf32>
    %6 = tpu.iota {dimensions = array<i32: 1>} : vector<8x128xi32>
    %c0_4 = arith.constant 0 : index
    %c0_5 = arith.constant 0 : index
    %7 = vector.load %arg5[%c0_4, %c0_5] : memref<8x1xf32, #tpu.memory_space<vmem>>, vector<8x1xf32>
    %8 = vector.broadcast %7 : vector<8x1xf32> to vector<8x128xf32>
    %9 = arith.subf %5, %8 : vector<8x128xf32>
    %10 = math.exp %9 : vector<8x128xf32>
    %c0_6 = arith.constant 0 : index
    %c0_7 = arith.constant 0 : index
    %11 = vector.load %arg4[%c0_6, %c0_7] : memref<8x1xi32, #tpu.memory_space<vmem>>, vector<8x1xi32>
    %c128_i32 = arith.constant 128 : i32
    %12 = arith.muli %arg0, %c128_i32 : i32
    %13 = vector.broadcast %12 : i32 to vector<8x1xi32>
    %14 = arith.subi %11, %13 : vector<8x1xi32>
    %15 = vector.broadcast %14 : vector<8x1xi32> to vector<8x128xi32>
    %16 = arith.cmpi eq, %6, %15 : vector<8x128xi32>
    %17 = arith.extui %16 : vector<8x128xi1> to vector<8x128xi32>
    %18 = arith.sitofp %17 : vector<8x128xi32> to vector<8x128xf32>
    %c0_i32_8 = arith.constant 0 : i32
    %19 = vector.broadcast %c0_i32_8 : i32 to vector<8x1xi32>
    %20 = arith.cmpi ne, %11, %19 : vector<8x1xi32>
    %21 = arith.extui %20 : vector<8x1xi1> to vector<8x1xi32>
    %22 = arith.sitofp %21 : vector<8x1xi32> to vector<8x1xf32>
    %23 = arith.subf %10, %18 : vector<8x128xf32>
    %24 = vector.broadcast %22 : vector<8x1xf32> to vector<8x128xf32>
    %25 = arith.mulf %23, %24 : vector<8x128xf32>
    %c0_9 = arith.constant 0 : index
    %c0_10 = arith.constant 0 : index
    %26 = vector.load %arg7[%c0_9, %c0_10] : memref<32x128xf32, #tpu.memory_space<vmem>>, vector<32x128xf32>
    %c0_11 = arith.constant 0 : index
    %c0_12 = arith.constant 0 : index
    %27 = vector.load %arg2[%c0_11, %c0_12] : memref<8x32xf32, #tpu.memory_space<vmem>>, vector<8x32xf32>
    %cst_13 = arith.constant dense<0.000000e+00> : vector<32x128xf32>
    %28 = tpu.matmul %27, %25, %cst_13 {dimension_numbers = #tpu.dot_dimension_numbers<[0], [0], [1], [1], [0, 1, 1, 1], [], []>} : vector<8x32xf32>, vector<8x128xf32>, vector<32x128xf32> -> vector<32x128xf32>
    %29 = arith.addf %26, %28 : vector<32x128xf32>
    %c0_14 = arith.constant 0 : index
    %c0_15 = arith.constant 0 : index
    %30 = vector.load %arg7[%c0_14, %c0_15] : memref<32x128xf32, #tpu.memory_space<vmem>>, vector<32x128xf32>
    tpu.vector_store %arg7[%c0_14, %c0_15], %29 {strides = array<i32>} : memref<32x128xf32, #tpu.memory_space<vmem>>, vector<32x128xf32>,
    %c1_i32 = arith.constant 1 : i32
    %31 = arith.cmpi eq, %arg1, %c1_i32 : i32
    %32 = arith.extui %31 : i1 to i32
    %c0_i32_16 = arith.constant 0 : i32
    %33 = arith.cmpi ne, %32, %c0_i32_16 : i32
    scf.if %33 {
      %c0_17 = arith.constant 0 : index
      %c0_18 = arith.constant 0 : index
      %34 = vector.load %arg7[%c0_17, %c0_18] : memref<32x128xf32, #tpu.memory_space<vmem>>, vector<32x128xf32>
      %c0_19 = arith.constant 0 : index
      %c0_20 = arith.constant 0 : index
      %35 = vector.load %arg7[%c0_19, %c0_20] : memref<32x128xf32, #tpu.memory_space<vmem>>, vector<32x128xf32>
      %36 = arith.mulf %34, %35 : vector<32x128xf32>
      %cst_21 = arith.constant dense<0.000000e+00> : vector<128xf32>
      %37 = vector.multi_reduction <add>, %36, %cst_21 [0] : vector<32x128xf32> to vector<128xf32>
      %38 = vector.shape_cast %37 : vector<128xf32> to vector<1x128xf32>
      %c0_22 = arith.constant 0 : index
      %c0_23 = arith.constant 0 : index
      %39 = vector.load %arg6[%c0_22, %c0_23] : memref<1x128xf32, #tpu.memory_space<vmem>>, vector<1x128xf32>
      tpu.vector_store %arg6[%c0_22, %c0_23], %38 {strides = array<i32>} : memref<1x128xf32, #tpu.memory_space<vmem>>, vector<1x128xf32>,
    } else {
    }
    return
  }
  func.func @transform_0(%arg0: i32, %arg1: i32) -> (i32, i32) {
    %c0_i32 = arith.constant 0 : i32
    %c0_i32_0 = arith.constant 0 : i32
    return %arg1, %c0_i32 : i32, i32
  }
  func.func @transform_1(%arg0: i32, %arg1: i32) -> (i32, i32) {
    %c0_i32 = arith.constant 0 : i32
    %c0_i32_0 = arith.constant 0 : i32
    return %c0_i32, %arg0 : i32, i32
  }
  func.func @transform_2(%arg0: i32, %arg1: i32) -> (i32, i32) {
    %c0_i32 = arith.constant 0 : i32
    %c0_i32_0 = arith.constant 0 : i32
    return %arg1, %c0_i32 : i32, i32
  }
  func.func @transform_3(%arg0: i32, %arg1: i32) -> (i32, i32) {
    %c0_i32 = arith.constant 0 : i32
    %c0_i32_0 = arith.constant 0 : i32
    return %arg1, %c0_i32 : i32, i32
  }
  func.func @transform_4(%arg0: i32, %arg1: i32) -> (i32, i32) {
    %c0_i32 = arith.constant 0 : i32
    %c0_i32_0 = arith.constant 0 : i32
    return %c0_i32, %arg0 : i32, i32
  }
}

</mosaic_0001>

<llo_original>
// kernel: gradnorm_forward.2
$region0: #{gradnorm_forward.2}
  #allocation0 [shape = 'u32[]', space=smem, size = 0x4, offset = 0x4, fixed_abs, tag = 'smem constant byte address 0x4 - core index']
  #allocation1 [shape = 'u32[144,128]{1,0:T(1,128)}', space=vmem, size = 0x12000, scoped, tag = 'internal scratch']
  #allocation2 [shape = 'f32[8,1]{1,0:T(8,128)}', space=vmem, size = 0x1000, scoped, tag = 'scratch operand']
  #allocation3 [shape = 'f32[8,1]{1,0:T(8,128)}', space=vmem, size = 0x1000, scoped, tag = 'scratch operand']
  #allocation4 [shape = 'f32[8,1]{1,0:T(8,128)}', space=vmem, size = 0x1000, scoped, tag = 'scratch operand']
  %s0 = inlined_call_operand.vmem [shape: f32[16,32], index: 0, kind: input, shape index: {}]
  %s1 = inlined_call_operand.hbm [shape: f32[32,256], index: 1, kind: input, shape index: {}]
  %s2 = inlined_call_operand.vmem [shape: s32[16,1], index: 2, kind: input, shape index: {}]
  %s3 = inlined_call_operand.vmem [shape: f32[16,1], index: 3, kind: output, shape index: {0}]
  %s4 = inlined_call_operand.vmem [shape: f32[16,1], index: 4, kind: output, shape index: {1}]
  %5 = xla_tuple %s3, %s4
  %s6 = sld [smem:[#allocation0]]
  $region65: #{gradnorm_forward.2} parent=0
    _
  %s8 = ssub.s32 1, %s6
  %s9 = scalar_select 0, %s8, %s6
  $region1: #{gradnorm_forward.2} parent=0
    #allocation5 [shape = 'u8[32768]{0}', space=vmem, size = 0x8000, scoped, tag = 'input window, operand 1']
    #allocation6 [shape = 's32[2]{0}', space=sflag, size = 0x8, scoped, tag = 'scoped memory for gradnorm_forward.2']
    %10 = vsyncpa [#allocation6], 0
    %s11 = scalar_lea.sflag [#allocation6], 1
    %12 = vsyncpa %s11, 0
    loop: start=0, step=1, limit=6
    $region2: #{gradnorm_forward.2} parent=1 // loop_pre_header
      _
    $region3: #{gradnorm_forward.2} parent=1 // loop_header
      %s14 = sphi 0, %s18
      %p15 = scmp.ge.s32.totalorder %s14, 6
      %s21 = sphi 0, %s33
      %s22 = sphi 0, %s29
      %s23 = sphi 0, %s21
      %s24 = sphi 0, %s22
      %s25 = sphi 0, %s23
      %s26 = sphi 0, %s24
      %s36 = sphi 0, %s38
      %s39 = sphi 0, %s36
      %s40 = sphi 0, %s39
      %s56 = sphi 0, %s40
      %s62 = sphi 0, %s64
      %s65 = sphi 0, %s62
      %s66 = sphi 0, %s65
      %s82 = sphi 0, %s66
      %s88 = sphi 0, %s90
      %s91 = sphi 0, %s88
      %s92 = sphi 0, %s91
      %s108 = sphi 0, %s92
      %s114 = sphi 0, %s116
      %s117 = sphi 0, %s114
      %s118 = sphi 0, %s117
      %s134 = sphi 0, %s118
      %s140 = sphi 0, %s142
      %s143 = sphi 0, %s140
      %s144 = sphi 0, %s143
      %s160 = sphi 0, %s144
    $region4: #{gradnorm_forward.2} parent=1 // loop_header_branch
      %17 = sbr.rel (%p15) target = $region8
    $region5: #{gradnorm_forward.2} parent=1 // loop_body
      %s19 = ssub.s32 %s14, 1
      %s20 = ssub.s32 %s14, 2
      %s27 = sadd.s32 1, %s22
      %p28 = scmp.ge.s32.totalorder %s27, 2
      %s29 = scalar_select %p28, 0, %s27
      %s30 = sadd.s32 1, %s21
      %s31 = scalar_select %p28, %s30, %s21
      %p32 = scmp.ge.s32.totalorder %s31, 2
      %s33 = scalar_select %p32, 0, %s31
      %s34 = ssub.s32 %s21, %s33
      %p35 = scmp.eq.s32.totalorder %s34, 0
      %s37 = sadd.s32 %s36, 1
      %s38 = scalar_select %p35, %s36, %s37
      %p41 = pneg %p35
      %p42 = scmp.eq.s32.totalorder %s14, 3
      %p43 = por %p41, %p42
      %p44 = scmp.ne.s32.totalorder %s36, %s39
      %p45 = scmp.eq.s32.totalorder %s14, 0
      %p46 = por %p44, %p45
      %p47 = scmp.ne.s32.totalorder %s36, %s39
      %p48 = scmp.eq.s32.totalorder %s19, 3
      %p49 = por %p47, %p48
      %p50 = scmp.ne.s32.totalorder %s39, %s40
      %p51 = scmp.eq.s32.totalorder %s19, 0
      %p52 = por %p50, %p51
      %p53 = scmp.ne.s32.totalorder %s39, %s40
      %p54 = scmp.eq.s32.totalorder %s20, 3
      %p55 = por %p53, %p54
      %p57 = scmp.ne.s32.totalorder %s40, %s56
      %p58 = scmp.eq.s32.totalorder %s20, 0
      %p59 = por %p57, %p58
      %s60 = ssub.s32 %s22, %s29
      %p61 = scmp.eq.s32.totalorder %s60, 0
      %s63 = sadd.s32 %s62, 1
      %s64 = scalar_select %p61, %s62, %s63
      %p67 = pneg %p61
      %p68 = scmp.eq.s32.totalorder %s14, 3
      %p69 = por %p67, %p68
      %p70 = scmp.ne.s32.totalorder %s62, %s65
      %p71 = scmp.eq.s32.totalorder %s14, 0
      %p72 = por %p70, %p71
      %p73 = scmp.ne.s32.totalorder %s62, %s65
      %p74 = scmp.eq.s32.totalorder %s19, 3
      %p75 = por %p73, %p74
      %p76 = scmp.ne.s32.totalorder %s65, %s66
      %p77 = scmp.eq.s32.totalorder %s19, 0
      %p78 = por %p76, %p77
      %p79 = scmp.ne.s32.totalorder %s65, %s66
      %p80 = scmp.eq.s32.totalorder %s20, 3
      %p81 = por %p79, %p80
      %p83 = scmp.ne.s32.totalorder %s66, %s82
      %p84 = scmp.eq.s32.totalorder %s20, 0
      %p85 = por %p83, %p84
      %s86 = ssub.s32 %s21, %s33
      %p87 = scmp.eq.s32.totalorder %s86, 0
      %s89 = sadd.s32 %s88, 1
      %s90 = scalar_select %p87, %s88, %s89
      %p93 = pneg %p87
      %p94 = scmp.eq.s32.totalorder %s14, 3
      %p95 = por %p93, %p94
      %p96 = scmp.ne.s32.totalorder %s88, %s91
      %p97 = scmp.eq.s32.totalorder %s14, 0
      %p98 = por %p96, %p97
      %p99 = scmp.ne.s32.totalorder %s88, %s91
      %p100 = scmp.eq.s32.totalorder %s19, 3
      %p101 = por %p99, %p100
      %p102 = scmp.ne.s32.totalorder %s91, %s92
      %p103 = scmp.eq.s32.totalorder %s19, 0
      %p104 = por %p102, %p103
      %p105 = scmp.ne.s32.totalorder %s91, %s92
      %p106 = scmp.eq.s32.totalorder %s20, 3
      %p107 = por %p105, %p106
      %p109 = scmp.ne.s32.totalorder %s92, %s108
      %p110 = scmp.eq.s32.totalorder %s20, 0
      %p111 = por %p109, %p110
      %s112 = ssub.s32 %s21, %s33
      %p113 = scmp.eq.s32.totalorder %s112, 0
      %s115 = sadd.s32 %s114, 1
      %s116 = scalar_select %p113, %s114, %s115
      %p119 = pneg %p113
      %p120 = scmp.eq.s32.totalorder %s14, 3
      %p121 = por %p119, %p120
      %p122 = scmp.ne.s32.totalorder %s114, %s117
      %p123 = scmp.eq.s32.totalorder %s14, 0
      %p124 = por %p122, %p123
      %p125 = scmp.ne.s32.totalorder %s114, %s117
      %p126 = scmp.eq.s32.totalorder %s19, 3
      %p127 = por %p125, %p126
      %p128 = scmp.ne.s32.totalorder %s117, %s118
      %p129 = scmp.eq.s32.totalorder %s19, 0
      %p130 = por %p128, %p129
      %p131 = scmp.ne.s32.totalorder %s117, %s118
      %p132 = scmp.eq.s32.totalorder %s20, 3
      %p133 = por %p131, %p132
      %p135 = scmp.ne.s32.totalorder %s118, %s134
      %p136 = scmp.eq.s32.totalorder %s20, 0
      %p137 = por %p135, %p136
      %s138 = ssub.s32 %s21, %s33
      %p139 = scmp.eq.s32.totalorder %s138, 0
      %s141 = sadd.s32 %s140, 1
      %s142 = scalar_select %p139, %s140, %s141
      %p145 = pneg %p139
      %p146 = scmp.eq.s32.totalorder %s14, 3
      %p147 = por %p145, %p146
      %p148 = scmp.ne.s32.totalorder %s140, %s143
      %p149 = scmp.eq.s32.totalorder %s14, 0
      %p150 = por %p148, %p149
      %p151 = scmp.ne.s32.totalorder %s140, %s143
      %p152 = scmp.eq.s32.totalorder %s19, 3
      %p153 = por %p151, %p152
      %p154 = scmp.ne.s32.totalorder %s143, %s144
      %p155 = scmp.eq.s32.totalorder %s19, 0
      %p156 = por %p154, %p155
      %p157 = scmp.ne.s32.totalorder %s143, %s144
      %p158 = scmp.eq.s32.totalorder %s20, 3
      %p159 = por %p157, %p158
      %p161 = scmp.ne.s32.totalorder %s144, %s160
      %p162 = scmp.eq.s32.totalorder %s20, 0
      %p163 = por %p161, %p162
      %p164 = scmp.le.s32.totalorder 1, %s14
      %p165 = scmp.lt.s32.totalorder %s14, 5
      %p166 = pnand %p164, %p165
      %p167 = pneg %p166
      // Predicated region
      $region9: #{gradnorm_forward.2} parent=5 // pred_check
        _
      $region10: #{gradnorm_forward.2} parent=5 // pred_check_branch
        %169 = sbr.rel (%p166) target = $region12
      $region11: #{gradnorm_forward.2} parent=5 // pred_region
        %s170 = ssub.s32 %s14, 1
      $region12: #{gradnorm_forward.2} parent=5 // pred_fallthru
        _
      %p171 = scmp.lt.s32.totalorder %s14, 4
      // Predicated region
      $region13: #{gradnorm_forward.2} parent=5 // pred_check
        %p172 = pneg %p171
      $region14: #{gradnorm_forward.2} parent=5 // pred_check_branch
        %174 = sbr.rel (%p172) target = $region16
      $region15: #{gradnorm_forward.2} parent=5 // pred_region
        // Predicated region
        $region17: #{gradnorm_forward.2} parent=15 // pred_check
          %p175 = pneg %p46
        $region18: #{gradnorm_forward.2} parent=15 // pred_check_branch
          %177 = sbr.rel (%p175) target = $region20
        $region19: #{gradnorm_forward.2} parent=15 // pred_region
          %p178 = scmp.lt.s32.totalorder %s21, 1
          %s179 = scalar_select %p178, %s21, 1
          %s180 = smul.addr %s179, 8
          %s181 = scalar_lea.vmem %s0, %s180
        $region20: #{gradnorm_forward.2} parent=15 // pred_fallthru
          _
        // Predicated region
        $region21: #{gradnorm_forward.2} parent=15 // pred_check
          %p182 = pneg %p72
        $region22: #{gradnorm_forward.2} parent=15 // pred_check_branch
          %184 = sbr.rel (%p182) target = $region24
        $region23: #{gradnorm_forward.2} parent=15 // pred_region
          %s185 = sand.u32 %s62, 1
          %s186 = scalar_lea.sflag [#allocation6], %s185
          %s187 = sand.u32 %s62, 1
          %s188 = smul.addr %s187, 32
          %s189 = scalar_lea.vmem [#allocation5], %s188
          %s191 = ssub.s32 512, 512
          %192 = vsyncadd %s186, %s191
          %s193 = smul.addr %s22, 128
          %s194 = scalar_lea.hbm %s1, %s193
          %s195 = sshll.u32 %s189, 4
          %s196 = int_to_ptr.vmem [resolvable:$true] %s195
          %201 = dma.hbm_to_vmem [thread:$0]  %s194, 512, %s196, %s186, 256, 128, 8
        $region24: #{gradnorm_forward.2} parent=15 // pred_fallthru
          _
        // Predicated region
        $region25: #{gradnorm_forward.2} parent=15 // pred_check
          %p202 = pneg %p98
        $region26: #{gradnorm_forward.2} parent=15 // pred_check_branch
          %204 = sbr.rel (%p202) target = $region28
        $region27: #{gradnorm_forward.2} parent=15 // pred_region
          %p205 = scmp.lt.s32.totalorder %s21, 1
          %s206 = scalar_select %p205, %s21, 1
          %s207 = smul.addr %s206, 8
          %s208 = scalar_lea.vmem %s2, %s207
        $region28: #{gradnorm_forward.2} parent=15 // pred_fallthru
          _
      $region16: #{gradnorm_forward.2} parent=5 // pred_fallthru
        _
      %p209 = scmp.le.s32.totalorder 1, %s14
      %p210 = scmp.lt.s32.totalorder %s14, 5
      %p211 = pnand %p209, %p210
      %p212 = pneg %p211
      // Predicated region
      $region29: #{gradnorm_forward.2} parent=5 // pred_check
        _
      $region30: #{gradnorm_forward.2} parent=5 // pred_check_branch
        %214 = sbr.rel (%p211) target = $region32
      $region31: #{gradnorm_forward.2} parent=5 // pred_region
        %s215 = ssub.s32 %s14, 1
        %s216 = sand.u32 %s65, 1
        %s217 = scalar_lea.sflag [#allocation6], %s216
        %s218 = sand.u32 %s65, 1
        %s219 = smul.addr %s218, 32
        %s220 = scalar_lea.vmem [#allocation5], %s219
        // Predicated region
        $region33: #{gradnorm_forward.2} parent=31 // pred_check
          %p221 = pneg %p78
        $region34: #{gradnorm_forward.2} parent=31 // pred_check_branch
          %223 = sbr.rel (%p221) target = $region36
        $region35: #{gradnorm_forward.2} parent=31 // pred_region
          %224 = dma.done %s217, 512
        $region36: #{gradnorm_forward.2} parent=31 // pred_fallthru
          _
        %p225 = scmp.lt.s32.totalorder %s23, 1
        %s226 = scalar_select %p225, %s23, 1
        %s227 = smul.addr %s226, 8
        %s228 = scalar_lea.vmem %s0, %s227
        %p229 = pneg %p52
        %p230 = pneg %p49
        %s231 = sand.u32 %s65, 1
        %s232 = scalar_lea.sflag [#allocation6], %s231
        %s233 = sand.u32 %s65, 1
        %s234 = smul.addr %s233, 32
        %s235 = scalar_lea.vmem [#allocation5], %s234
        %p236 = pneg %p78
        %p237 = pneg %p75
        %p238 = scmp.lt.s32.totalorder %s23, 1
        %s239 = scalar_select %p238, %s23, 1
        %s240 = smul.addr %s239, 8
        %s241 = scalar_lea.vmem %s2, %s240
        %p242 = pneg %p104
        %p243 = pneg %p101
        %p244 = pneg %p130
        %p245 = pneg %p127
        %p246 = scmp.lt.s32.totalorder %s23, 1
        %s247 = scalar_select %p246, %s23, 1
        %s248 = smul.addr %s247, 8
        %s249 = scalar_lea.vmem %s3, %s248
        %p250 = pneg %p156
        %p251 = pneg %p153
        %p252 = scmp.lt.s32.totalorder %s23, 1
        %s253 = scalar_select %p252, %s23, 1
        %s254 = smul.addr %s253, 8
        %s255 = scalar_lea.vmem %s4, %s254
        %p256 = scmp.lt.s32.totalorder %s23, 1
        %s257 = scalar_select %p256, %s23, 1
        %s258 = smul.addr %s257, 8
        %s259 = scalar_lea.vmem %s0, %s258
        %p260 = scmp.lt.s32.totalorder %s23, 1
        %s261 = scalar_select %p260, %s23, 1
        %s262 = smul.addr %s261, 8
        %s263 = scalar_lea.vmem %s2, %s262
        %p264 = scmp.lt.s32.totalorder %s23, 1
        %s265 = scalar_select %p264, %s23, 1
        %s266 = smul.addr %s265, 8
        %s267 = scalar_lea.vmem %s3, %s266
        %p268 = scmp.lt.s32.totalorder %s23, 1
        %s269 = scalar_select %p268, %s23, 1
        %s270 = smul.addr %s269, 8
        %s271 = scalar_lea.vmem %s4, %s270
        %p272 = scmp.eq.s32.totalorder %s24, 0
        // Predicated region
        $region37: #{gradnorm_forward.2} parent=31 // pred_check
          %p273 = pneg %p272
        $region38: #{gradnorm_forward.2} parent=31 // pred_check_branch
          %275 = sbr.rel (%p273) target = $region40
        $region39: #{gradnorm_forward.2} parent=31 // pred_region
          %vm276 = vcmask 7168
          %277 = vst.msk [vmem:[#allocation2] sm:$0xff] %vm276, -3e+38
          %278 = vst.msk [vmem:[#allocation3] sm:$0xff] %vm276, 0.0
          %279 = vst.msk [vmem:[#allocation4] sm:$0xff] %vm276, 0.0
        $region40: #{gradnorm_forward.2} parent=31 // pred_fallthru
          _
        %v280 = vld [vmem:[%s259] sm:$0xff]
        %v281 = vld [vmem:[%s220] sm:$0xff]
        %v282 = vld [vmem:[%s220 + $0x8] sm:$0xff]
        %v283 = vld [vmem:[%s220 + $0x10] sm:$0xff]
        %v284 = vld [vmem:[%s220 + $0x18] sm:$0xff]
        %vm285 = vcmask 261120
        %v287 = vsel %vm285, %v280, 0
        %289 = vmatprep.subr.mxu0 0.0
        %290 = vmatpush1.msra.mxu0 0.0
        %291 = vmatprep.subr.mxu0 0.0
        %292 = vmatpush1.msra.mxu0 0.0
        %293 = vmatprep.subr.mxu0 0.0
        %294 = vmatpush1.msra.mxu0 0.0
        %295 = vmatprep.subr.mxu0 0.0
        %296 = vmatpush1.msra.mxu0 0.0
        %297 = vmatprep.subr.mxu0 0.0
        %298 = vmatpush1.msra.mxu0 0.0
        %299 = vmatprep.subr.mxu0 0.0
        %300 = vmatpush1.msra.mxu0 0.0
        %301 = vmatprep.subr.mxu0 0.0
        %302 = vmatpush1.msra.mxu0 0.0
        %303 = vmatprep.subr.mxu0 0.0
        %304 = vmatpush1.msra.mxu0 0.0
        %305 = vmatprep.subr.mxu0 0.0
        %306 = vmatpush1.msra.mxu0 0.0
        %307 = vmatprep.subr.mxu0 0.0
        %308 = vmatpush1.msra.mxu0 0.0
        %309 = vmatprep.subr.mxu0 0.0
        %310 = vmatpush1.msra.mxu0 0.0
        %311 = vmatprep.subr.mxu0 0.0
        %312 = vmatpush1.msra.mxu0 0.0
        %313 = vmatprep.subr.mxu0 0.0
        %314 = vmatpush1.msra.mxu0 %v284
        %315 = vmatprep.subr.mxu0 0.0
        %316 = vmatpush1.msra.mxu0 %v283
        %317 = vmatprep.subr.mxu0 0.0
        %318 = vmatpush1.msra.mxu0 %v282
        %319 = vmatprep.subr.mxu0 0.0
        %320 = vmatpush1.msra.mxu0 %v281
        %321 = vmatprep.subr.mxu0 0.0
        %322 = vmatpush2.msra.mxu0 0.0
        %323 = vmatprep.subr.mxu0 0.0
        %324 = vmatpush2.msra.mxu0 0.0
        %325 = vmatprep.subr.mxu0 0.0
        %326 = vmatpush2.msra.mxu0 0.0
        %327 = vmatprep.subr.mxu0 0.0
        %328 = vmatpush2.msra.mxu0 0.0
        %329 = vmatprep.subr.mxu0 0.0
        %330 = vmatpush2.msra.mxu0 0.0
        %331 = vmatprep.subr.mxu0 0.0
        %332 = vmatpush2.msra.mxu0 0.0
        %333 = vmatprep.subr.mxu0 0.0
        %334 = vmatpush2.msra.mxu0 0.0
        %335 = vmatprep.subr.mxu0 0.0
        %336 = vmatpush2.msra.mxu0 0.0
        %337 = vmatprep.subr.mxu0 0.0
        %338 = vmatpush2.msra.mxu0 0.0
        %339 = vmatprep.subr.mxu0 0.0
        %340 = vmatpush2.msra.mxu0 0.0
        %341 = vmatprep.subr.mxu0 0.0
        %342 = vmatpush2.msra.mxu0 0.0
        %343 = vmatprep.subr.mxu0 0.0
        %344 = vmatpush2.msra.mxu0 0.0
        %345 = vmatprep.subr.mxu0 0.0
        %346 = vmatpush2.msra.mxu0 0.0
        %347 = vmatprep.subr.mxu0 0.0
        %348 = vmatpush2.msra.mxu0 0.0
        %349 = vmatprep.subr.mxu0 0.0
        %350 = vmatpush2.msra.mxu0 0.0
        %351 = vmatprep.subr.mxu0 0.0
        %352 = vmatpush2.msra.mxu0 0.0
        %353 = vmatprep.mubr.f32.mxu0 0.0
        %354 = vmatmul.mubr.f32.gmra.mxu0 %v287
        %v355 = vpop.f32.mrf.mxu0
        %v356 = vadd.f32 0.0, %v355
        %v357 = vpop.f32.mrf.mxu0
        %358 = vdwg.mxu0
        %v359 = vlaneseq
        %v360 = vand.u32 %v359, 127
        %361 = vmax.xlane.f32.xlu0 %v356
        %v362 = vpop.xlane.xlu0 %361
        %v363 = vld [vmem:[#allocation2] sm:$0xff]
        %v364 = vmax.f32 %v363, %v362
        %v365 = vld [vmem:[#allocation3] sm:$0xff]
        %v366 = vsub.f32 %v363, %v364
        %v367 = vmul.f32 %v366, 1.442695
        %v368 = vpow.pop %v367
        %v369 = vmul.f32 %v365, %v368
        %371 = vset.pattern.permute.xlu0 0
        %372 = vperm.xlu0 %371, %v364
        %v373 = vpop.permute.xlu0 %372
        %v375 = vsub.f32 %v356, %v373
        %v376 = vmul.f32 %v375, 1.442695
        %v377 = vpow.pop %v376
        %378 = vadd.xlane.f32.xlu0 %v377
        %v379 = vpop.xlane.xlu0 %378
        %v380 = vadd.f32 %v369, %v379
        %vm381 = vcmask 7168
        %382 = vst.msk [vmem:[#allocation3] sm:$0xff] %vm381, %v380
        %383 = vst.msk [vmem:[#allocation2] sm:$0xff] %vm381, %v364
        %v384 = vld [vmem:[%s263] sm:$0xff]
        %s385 = smul.u32 %s24, 128
        %v386 = vstv %s385
        %v387 = vsub.s32 %v384, %v386
        %v388 = vld [vmem:[#allocation4] sm:$0xff]
        %389 = vset.pattern.permute.xlu0 0
        %390 = vperm.xlu0 %389, %v387
        %v391 = vpop.permute.xlu0 %390
        %vm392 = vcmp.eq.s32.totalorder %v360, %v391
        %v393 = vsel %vm392, %v356, 0.0
        %394 = vadd.xlane.f32.xlu0 %v393
        %v395 = vpop.xlane.xlu0 %394
        %v396 = vadd.f32 %v388, %v395
        %397 = vst.msk [vmem:[#allocation4] sm:$0xff] %vm381, %v396
        %p398 = scmp.eq.s32.totalorder %s24, 1
        // Predicated region
        $region41: #{gradnorm_forward.2} parent=31 // pred_check
          %p399 = pneg %p398
        $region42: #{gradnorm_forward.2} parent=31 // pred_check_branch
          %401 = sbr.rel (%p399) target = $region44
        $region43: #{gradnorm_forward.2} parent=31 // pred_region
          %v402 = vld [vmem:[#allocation2] sm:$0xff]
          %v403 = vld [vmem:[#allocation3] sm:$0xff]
          %v404 = vlog2.pop %v403
          %v405 = vmul.f32 %v404, 0.6931472
          %v406 = vadd.f32 %v402, %v405
          %407 = vst.msk [vmem:[%s267] sm:$0xff] %vm381, %v406
          %v408 = vld [vmem:[#allocation4] sm:$0xff]
          %409 = vst.msk [vmem:[%s271] sm:$0xff] %vm381, %v408
        $region44: #{gradnorm_forward.2} parent=31 // pred_fallthru
          _
        %p410 = scmp.lt.s32.totalorder %s23, 1
        %s411 = scalar_select %p410, %s23, 1
        %s412 = smul.addr %s411, 8
        %s413 = scalar_lea.vmem %s3, %s412
        %p414 = scmp.lt.s32.totalorder %s23, 1
        %s415 = scalar_select %p414, %s23, 1
        %s416 = smul.addr %s415, 8
        %s417 = scalar_lea.vmem %s4, %s416
        // Predicated region
        $region45: #{gradnorm_forward.2} parent=31 // pred_check
          %p418 = pneg %p127
        $region46: #{gradnorm_forward.2} parent=31 // pred_check_branch
          %420 = sbr.rel (%p418) target = $region48
        $region47: #{gradnorm_forward.2} parent=31 // pred_region
          _
        $region48: #{gradnorm_forward.2} parent=31 // pred_fallthru
          _
        // Predicated region
        $region49: #{gradnorm_forward.2} parent=31 // pred_check
          %p421 = pneg %p153
        $region50: #{gradnorm_forward.2} parent=31 // pred_check_branch
          %423 = sbr.rel (%p421) target = $region52
        $region51: #{gradnorm_forward.2} parent=31 // pred_region
          _
        $region52: #{gradnorm_forward.2} parent=31 // pred_fallthru
          _
      $region32: #{gradnorm_forward.2} parent=5 // pred_fallthru
        _
      %p424 = scmp.le.s32.totalorder 2, %s14
      // Predicated region
      $region53: #{gradnorm_forward.2} parent=5 // pred_check
        %p425 = pneg %p424
      $region54: #{gradnorm_forward.2} parent=5 // pred_check_branch
        %427 = sbr.rel (%p425) target = $region56
      $region55: #{gradnorm_forward.2} parent=5 // pred_region
        %s428 = ssub.s32 %s14, 2
        // Predicated region
        $region57: #{gradnorm_forward.2} parent=55 // pred_check
          %p429 = pneg %p133
        $region58: #{gradnorm_forward.2} parent=55 // pred_check_branch
          %431 = sbr.rel (%p429) target = $region60
        $region59: #{gradnorm_forward.2} parent=55 // pred_region
          %p432 = scmp.lt.s32.totalorder %s25, 1
          %s433 = scalar_select %p432, %s25, 1
          %s434 = smul.addr %s433, 8
          %s435 = scalar_lea.vmem %s3, %s434
        $region60: #{gradnorm_forward.2} parent=55 // pred_fallthru
          _
        // Predicated region
        $region61: #{gradnorm_forward.2} parent=55 // pred_check
          %p436 = pneg %p159
        $region62: #{gradnorm_forward.2} parent=55 // pred_check_branch
          %438 = sbr.rel (%p436) target = $region64
        $region63: #{gradnorm_forward.2} parent=55 // pred_region
          %p439 = scmp.lt.s32.totalorder %s25, 1
          %s440 = scalar_select %p439, %s25, 1
          %s441 = smul.addr %s440, 8
          %s442 = scalar_lea.vmem %s4, %s441
        $region64: #{gradnorm_forward.2} parent=55 // pred_fallthru
          _
      $region56: #{gradnorm_forward.2} parent=5 // pred_fallthru
        _
    $region6: #{gradnorm_forward.2} parent=1 // loop_footer
      %s18 = sadd.s32 1, %s14
    $region7: #{gradnorm_forward.2} parent=1 // loop_footer_branch
      %13 = sbr.rel target = $region3
    $region8: #{gradnorm_forward.2} parent=1 // loop_exit
      _
    %443 = vsyncpa [#allocation6], 1
    %s444 = scalar_lea.sflag [#allocation6], 1
    %445 = vsyncpa %s444, 1

// kernel: gradnorm_forward.3
$region0: #{gradnorm_forward.3}
  #allocation0 [shape = 'u32[]', space=smem, size = 0x4, offset = 0x4, fixed_abs, tag = 'smem constant byte address 0x4 - core index']
  #allocation1 [shape = 'u32[144,128]{1,0:T(1,128)}', space=vmem, size = 0x12000, scoped, tag = 'internal scratch']
  #allocation2 [shape = 'f32[32,128]{1,0:T(8,128)}', space=vmem, size = 0x4000, scoped, tag = 'scratch operand']
  %s0 = inlined_call_operand.vmem [shape: f32[16,32], index: 0, kind: input, shape index: {}]
  %s1 = inlined_call_operand.vmem [shape: f32[32,256], index: 1, kind: input, shape index: {}]
  %s2 = inlined_call_operand.vmem [shape: s32[16,1], index: 2, kind: input, shape index: {}]
  %s3 = inlined_call_operand.vmem [shape: f32[16,1], index: 3, kind: input, shape index: {}]
  %s4 = inlined_call_operand.vmem [shape: f32[1,256], index: 4, kind: output, shape index: {}]
  %s5 = sld [smem:[#allocation0]]
  $region95: #{gradnorm_forward.3} parent=0
    _
  %s7 = ssub.s32 1, %s5
  %s8 = scalar_select 0, %s7, %s5
  $region1: #{gradnorm_forward.3} parent=0
    #allocation3 [shape = 'u8[32768]{0}', space=vmem, size = 0x8000, scoped, tag = 'input window, operand 1']
    loop: start=0, step=1, limit=6
    $region2: #{gradnorm_forward.3} parent=1 // loop_pre_header
      _
    $region3: #{gradnorm_forward.3} parent=1 // loop_header
      %s10 = sphi 0, %s14
      %p11 = scmp.ge.s32.totalorder %s10, 6
      %s17 = sphi 0, %s29
      %s18 = sphi 0, %s25
      %s19 = sphi 0, %s17
      %s20 = sphi 0, %s18
      %s21 = sphi 0, %s19
      %s22 = sphi 0, %s20
      %s32 = sphi 0, %s34
      %s35 = sphi 0, %s32
      %s36 = sphi 0, %s35
      %s52 = sphi 0, %s36
      %s58 = sphi 0, %s60
      %s61 = sphi 0, %s58
      %s62 = sphi 0, %s61
      %s78 = sphi 0, %s62
      %s84 = sphi 0, %s86
      %s87 = sphi 0, %s84
      %s88 = sphi 0, %s87
      %s104 = sphi 0, %s88
      %s110 = sphi 0, %s112
      %s113 = sphi 0, %s110
      %s114 = sphi 0, %s113
      %s130 = sphi 0, %s114
      %s136 = sphi 0, %s138
      %s139 = sphi 0, %s136
      %s140 = sphi 0, %s139
      %s156 = sphi 0, %s140
    $region4: #{gradnorm_forward.3} parent=1 // loop_header_branch
      %13 = sbr.rel (%p11) target = $region8
    $region5: #{gradnorm_forward.3} parent=1 // loop_body
      %s15 = ssub.s32 %s10, 1
      %s16 = ssub.s32 %s10, 2
      %s23 = sadd.s32 1, %s18
      %p24 = scmp.ge.s32.totalorder %s23, 2
      %s25 = scalar_select %p24, 0, %s23
      %s26 = sadd.s32 1, %s17
      %s27 = scalar_select %p24, %s26, %s17
      %p28 = scmp.ge.s32.totalorder %s27, 2
      %s29 = scalar_select %p28, 0, %s27
      %s30 = ssub.s32 %s18, %s25
      %p31 = scmp.eq.s32.totalorder %s30, 0
      %s33 = sadd.s32 %s32, 1
      %s34 = scalar_select %p31, %s32, %s33
      %p37 = pneg %p31
      %p38 = scmp.eq.s32.totalorder %s10, 3
      %p39 = por %p37, %p38
      %p40 = scmp.ne.s32.totalorder %s32, %s35
      %p41 = scmp.eq.s32.totalorder %s10, 0
      %p42 = por %p40, %p41
      %p43 = scmp.ne.s32.totalorder %s32, %s35
      %p44 = scmp.eq.s32.totalorder %s15, 3
      %p45 = por %p43, %p44
      %p46 = scmp.ne.s32.totalorder %s35, %s36
      %p47 = scmp.eq.s32.totalorder %s15, 0
      %p48 = por %p46, %p47
      %p49 = scmp.ne.s32.totalorder %s35, %s36
      %p50 = scmp.eq.s32.totalorder %s16, 3
      %p51 = por %p49, %p50
      %p53 = scmp.ne.s32.totalorder %s36, %s52
      %p54 = scmp.eq.s32.totalorder %s16, 0
      %p55 = por %p53, %p54
      %s56 = ssub.s32 %s17, %s29
      %p57 = scmp.eq.s32.totalorder %s56, 0
      %s59 = sadd.s32 %s58, 1
      %s60 = scalar_select %p57, %s58, %s59
      %p63 = pneg %p57
      %p64 = scmp.eq.s32.totalorder %s10, 3
      %p65 = por %p63, %p64
      %p66 = scmp.ne.s32.totalorder %s58, %s61
      %p67 = scmp.eq.s32.totalorder %s10, 0
      %p68 = por %p66, %p67
      %p69 = scmp.ne.s32.totalorder %s58, %s61
      %p70 = scmp.eq.s32.totalorder %s15, 3
      %p71 = por %p69, %p70
      %p72 = scmp.ne.s32.totalorder %s61, %s62
      %p73 = scmp.eq.s32.totalorder %s15, 0
      %p74 = por %p72, %p73
      %p75 = scmp.ne.s32.totalorder %s61, %s62
      %p76 = scmp.eq.s32.totalorder %s16, 3
      %p77 = por %p75, %p76
      %p79 = scmp.ne.s32.totalorder %s62, %s78
      %p80 = scmp.eq.s32.totalorder %s16, 0
      %p81 = por %p79, %p80
      %s82 = ssub.s32 %s18, %s25
      %p83 = scmp.eq.s32.totalorder %s82, 0
      %s85 = sadd.s32 %s84, 1
      %s86 = scalar_select %p83, %s84, %s85
      %p89 = pneg %p83
      %p90 = scmp.eq.s32.totalorder %s10, 3
      %p91 = por %p89, %p90
      %p92 = scmp.ne.s32.totalorder %s84, %s87
      %p93 = scmp.eq.s32.totalorder %s10, 0
      %p94 = por %p92, %p93
      %p95 = scmp.ne.s32.totalorder %s84, %s87
      %p96 = scmp.eq.s32.totalorder %s15, 3
      %p97 = por %p95, %p96
      %p98 = scmp.ne.s32.totalorder %s87, %s88
      %p99 = scmp.eq.s32.totalorder %s15, 0
      %p100 = por %p98, %p99
      %p101 = scmp.ne.s32.totalorder %s87, %s88
      %p102 = scmp.eq.s32.totalorder %s16, 3
      %p103 = por %p101, %p102
      %p105 = scmp.ne.s32.totalorder %s88, %s104
      %p106 = scmp.eq.s32.totalorder %s16, 0
      %p107 = por %p105, %p106
      %s108 = ssub.s32 %s18, %s25
      %p109 = scmp.eq.s32.totalorder %s108, 0
      %s111 = sadd.s32 %s110, 1
      %s112 = scalar_select %p109, %s110, %s111
      %p115 = pneg %p109
      %p116 = scmp.eq.s32.totalorder %s10, 3
      %p117 = por %p115, %p116
      %p118 = scmp.ne.s32.totalorder %s110, %s113
      %p119 = scmp.eq.s32.totalorder %s10, 0
      %p120 = por %p118, %p119
      %p121 = scmp.ne.s32.totalorder %s110, %s113
      %p122 = scmp.eq.s32.totalorder %s15, 3
      %p123 = por %p121, %p122
      %p124 = scmp.ne.s32.totalorder %s113, %s114
      %p125 = scmp.eq.s32.totalorder %s15, 0
      %p126 = por %p124, %p125
      %p127 = scmp.ne.s32.totalorder %s113, %s114
      %p128 = scmp.eq.s32.totalorder %s16, 3
      %p129 = por %p127, %p128
      %p131 = scmp.ne.s32.totalorder %s114, %s130
      %p132 = scmp.eq.s32.totalorder %s16, 0
      %p133 = por %p131, %p132
      %s134 = ssub.s32 %s17, %s29
      %p135 = scmp.eq.s32.totalorder %s134, 0
      %s137 = sadd.s32 %s136, 1
      %s138 = scalar_select %p135, %s136, %s137
      %p141 = pneg %p135
      %p142 = scmp.eq.s32.totalorder %s10, 3
      %p143 = por %p141, %p142
      %p144 = scmp.ne.s32.totalorder %s136, %s139
      %p145 = scmp.eq.s32.totalorder %s10, 0
      %p146 = por %p144, %p145
      %p147 = scmp.ne.s32.totalorder %s136, %s139
      %p148 = scmp.eq.s32.totalorder %s15, 3
      %p149 = por %p147, %p148
      %p150 = scmp.ne.s32.totalorder %s139, %s140
      %p151 = scmp.eq.s32.totalorder %s15, 0
      %p152 = por %p150, %p151
      %p153 = scmp.ne.s32.totalorder %s139, %s140
      %p154 = scmp.eq.s32.totalorder %s16, 3
      %p155 = por %p153, %p154
      %p157 = scmp.ne.s32.totalorder %s140, %s156
      %p158 = scmp.eq.s32.totalorder %s16, 0
      %p159 = por %p157, %p158
      %p160 = scmp.le.s32.totalorder 1, %s10
      %p161 = scmp.lt.s32.totalorder %s10, 5
      %p162 = pnand %p160, %p161
      %p163 = pneg %p162
      // Predicated region
      $region9: #{gradnorm_forward.3} parent=5 // pred_check
        _
      $region10: #{gradnorm_forward.3} parent=5 // pred_check_branch
        %165 = sbr.rel (%p162) target = $region12
      $region11: #{gradnorm_forward.3} parent=5 // pred_region
        %s166 = ssub.s32 %s10, 1
      $region12: #{gradnorm_forward.3} parent=5 // pred_fallthru
        _
      %p167 = scmp.lt.s32.totalorder %s10, 4
      // Predicated region
      $region13: #{gradnorm_forward.3} parent=5 // pred_check
        %p168 = pneg %p167
      $region14: #{gradnorm_forward.3} parent=5 // pred_check_branch
        %170 = sbr.rel (%p168) target = $region16
      $region15: #{gradnorm_forward.3} parent=5 // pred_region
        // Predicated region
        $region17: #{gradnorm_forward.3} parent=15 // pred_check
          %p171 = pneg %p42
        $region18: #{gradnorm_forward.3} parent=15 // pred_check_branch
          %173 = sbr.rel (%p171) target = $region20
        $region19: #{gradnorm_forward.3} parent=15 // pred_region
          %p174 = scmp.lt.s32.totalorder %s18, 1
          %s175 = scalar_select %p174, %s18, 1
          %s176 = smul.addr %s175, 8
          %s177 = scalar_lea.vmem %s0, %s176
        $region20: #{gradnorm_forward.3} parent=15 // pred_fallthru
          _
        // Predicated region
        $region21: #{gradnorm_forward.3} parent=15 // pred_check
          %p178 = pneg %p68
        $region22: #{gradnorm_forward.3} parent=15 // pred_check_branch
          %180 = sbr.rel (%p178) target = $region24
        $region23: #{gradnorm_forward.3} parent=15 // pred_region
          %s181 = sand.u32 %s58, 1
          %s182 = sand.u32 %s58, 1
          %s183 = smul.addr %s182, 32
          %s184 = scalar_lea.vmem [#allocation3], %s183
          %s185 = smul.addr %s17, 8
          %s186 = scalar_lea.vmem %s1, %s185
          // Predicated region
          $region25: #{gradnorm_forward.3} parent=23 // pred_check
            _
          $region26: #{gradnorm_forward.3} parent=23 // pred_check_branch
            %188 = sbr.rel (0) target = $region28
          $region27: #{gradnorm_forward.3} parent=23 // pred_region
            // Predicated region
            $region29: #{gradnorm_forward.3} parent=27 // pred_check
              _
            $region30: #{gradnorm_forward.3} parent=27 // pred_check_branch
              %190 = sbr.rel (0) target = $region32
            $region31: #{gradnorm_forward.3} parent=27 // pred_region
              // Predicated region
              $region44: #{gradnorm_forward.3} parent=31 // pred_check
                _
              $region45: #{gradnorm_forward.3} parent=31 // pred_check_branch
                %212 = sbr.rel (0) target = $region47
              $region46: #{gradnorm_forward.3} parent=31 // pred_region
                loop: start=0, step=1, limit=1
                $region48: #{gradnorm_forward.3} parent=46 // loop_pre_header
                  _
                $region49: #{gradnorm_forward.3} parent=46 // loop_header
                  %s214 = sphi 0, %s218
                  %p215 = scmp.ge.s32.totalorder %s214, 1
                  %s219 = sphi %s186, %s186
                  %s220 = sphi %s184, %s184
                $region50: #{gradnorm_forward.3} parent=46 // loop_header_branch
                  %217 = sbr.rel (%p215) target = $region54
                $region51: #{gradnorm_forward.3} parent=46 // loop_body
                  %v221 = vld [vmem:[%s219] sm:$0xff]
                  %222 = vst [vmem:[%s220] sm:$0xff] %v221
                  %v223 = vld [vmem:[%s219 + $0x10] sm:$0xff]
                  %224 = vst [vmem:[%s220 + $0x8] sm:$0xff] %v223
                  %v225 = vld [vmem:[%s219 + $0x20] sm:$0xff]
                  %226 = vst [vmem:[%s220 + $0x10] sm:$0xff] %v225
                  %v227 = vld [vmem:[%s219 + $0x30] sm:$0xff]
                  %228 = vst [vmem:[%s220 + $0x18] sm:$0xff] %v227
                $region52: #{gradnorm_forward.3} parent=46 // loop_footer
                  %s218 = sadd.s32 1, %s214
                $region53: #{gradnorm_forward.3} parent=46 // loop_footer_branch
                  %213 = sbr.rel target = $region49
                $region54: #{gradnorm_forward.3} parent=46 // loop_exit
                  _
              $region47: #{gradnorm_forward.3} parent=31 // pred_fallthru
                _
              // Predicated region
              $region55: #{gradnorm_forward.3} parent=31 // pred_check
                _
              $region56: #{gradnorm_forward.3} parent=31 // pred_check_branch
                %230 = sbr.rel target = $region58
              $region57: #{gradnorm_forward.3} parent=31 // pred_region
                _
              $region58: #{gradnorm_forward.3} parent=31 // pred_fallthru
                _
            $region32: #{gradnorm_forward.3} parent=27 // pred_fallthru
              _
            // Predicated region
            $region33: #{gradnorm_forward.3} parent=27 // pred_check
              _
            $region34: #{gradnorm_forward.3} parent=27 // pred_check_branch
              %192 = sbr.rel target = $region36
            $region35: #{gradnorm_forward.3} parent=27 // pred_region
              %s194 = ssub.s32 256, 1
              loop: start=0, step=1, limit=1
              $region37: #{gradnorm_forward.3} parent=35 // loop_pre_header
                _
              $region38: #{gradnorm_forward.3} parent=35 // loop_header
                %s196 = sphi 0, %s200
                %p197 = scmp.ge.s32.totalorder %s196, 1
                %s201 = sphi %s186, %s186
                %s202 = sphi %s184, %s184
              $region39: #{gradnorm_forward.3} parent=35 // loop_header_branch
                %199 = sbr.rel (%p197) target = $region43
              $region40: #{gradnorm_forward.3} parent=35 // loop_body
                %v203 = vld [vmem:[%s201] sm:%s194]
                %204 = vst [vmem:[%s202] sm:%s194] %v203
                %v205 = vld [vmem:[%s201 + $0x10] sm:%s194]
                %206 = vst [vmem:[%s202 + $0x8] sm:%s194] %v205
                %v207 = vld [vmem:[%s201 + $0x20] sm:%s194]
                %208 = vst [vmem:[%s202 + $0x10] sm:%s194] %v207
                %v209 = vld [vmem:[%s201 + $0x30] sm:%s194]
                %210 = vst [vmem:[%s202 + $0x18] sm:%s194] %v209
              $region41: #{gradnorm_forward.3} parent=35 // loop_footer
                %s200 = sadd.s32 1, %s196
              $region42: #{gradnorm_forward.3} parent=35 // loop_footer_branch
                %195 = sbr.rel target = $region38
              $region43: #{gradnorm_forward.3} parent=35 // loop_exit
                _
            $region36: #{gradnorm_forward.3} parent=27 // pred_fallthru
              _
          $region28: #{gradnorm_forward.3} parent=23 // pred_fallthru
            _
          %231 = vnop
        $region24: #{gradnorm_forward.3} parent=15 // pred_fallthru
          _
        // Predicated region
        $region59: #{gradnorm_forward.3} parent=15 // pred_check
          %p232 = pneg %p94
        $region60: #{gradnorm_forward.3} parent=15 // pred_check_branch
          %234 = sbr.rel (%p232) target = $region62
        $region61: #{gradnorm_forward.3} parent=15 // pred_region
          %p235 = scmp.lt.s32.totalorder %s18, 1
          %s236 = scalar_select %p235, %s18, 1
          %s237 = smul.addr %s236, 8
          %s238 = scalar_lea.vmem %s2, %s237
        $region62: #{gradnorm_forward.3} parent=15 // pred_fallthru
          _
        // Predicated region
        $region63: #{gradnorm_forward.3} parent=15 // pred_check
          %p239 = pneg %p120
        $region64: #{gradnorm_forward.3} parent=15 // pred_check_branch
          %241 = sbr.rel (%p239) target = $region66
        $region65: #{gradnorm_forward.3} parent=15 // pred_region
          %p242 = scmp.lt.s32.totalorder %s18, 1
          %s243 = scalar_select %p242, %s18, 1
          %s244 = smul.addr %s243, 8
          %s245 = scalar_lea.vmem %s3, %s244
        $region66: #{gradnorm_forward.3} parent=15 // pred_fallthru
          _
      $region16: #{gradnorm_forward.3} parent=5 // pred_fallthru
        _
      %p246 = scmp.le.s32.totalorder 1, %s10
      %p247 = scmp.lt.s32.totalorder %s10, 5
      %p248 = pnand %p246, %p247
      %p249 = pneg %p248
      // Predicated region
      $region67: #{gradnorm_forward.3} parent=5 // pred_check
        _
      $region68: #{gradnorm_forward.3} parent=5 // pred_check_branch
        %251 = sbr.rel (%p248) target = $region70
      $region69: #{gradnorm_forward.3} parent=5 // pred_region
        %s252 = ssub.s32 %s10, 1
        %s253 = sand.u32 %s61, 1
        %s254 = sand.u32 %s61, 1
        %s255 = smul.addr %s254, 32
        %s256 = scalar_lea.vmem [#allocation3], %s255
        // Predicated region
        $region71: #{gradnorm_forward.3} parent=69 // pred_check
          %p257 = pneg %p74
        $region72: #{gradnorm_forward.3} parent=69 // pred_check_branch
          %259 = sbr.rel (%p257) target = $region74
        $region73: #{gradnorm_forward.3} parent=69 // pred_region
          _
        $region74: #{gradnorm_forward.3} parent=69 // pred_fallthru
          _
        %p260 = scmp.lt.s32.totalorder %s20, 1
        %s261 = scalar_select %p260, %s20, 1
        %s262 = smul.addr %s261, 8
        %s263 = scalar_lea.vmem %s0, %s262
        %p264 = pneg %p48
        %p265 = pneg %p45
        %s266 = sand.u32 %s61, 1
        %s267 = sand.u32 %s61, 1
        %s268 = smul.addr %s267, 32
        %s269 = scalar_lea.vmem [#allocation3], %s268
        %p270 = pneg %p74
        %p271 = pneg %p71
        %p272 = scmp.lt.s32.totalorder %s20, 1
        %s273 = scalar_select %p272, %s20, 1
        %s274 = smul.addr %s273, 8
        %s275 = scalar_lea.vmem %s2, %s274
        %p276 = pneg %p100
        %p277 = pneg %p97
        %p278 = scmp.lt.s32.totalorder %s20, 1
        %s279 = scalar_select %p278, %s20, 1
        %s280 = smul.addr %s279, 8
        %s281 = scalar_lea.vmem %s3, %s280
        %p282 = pneg %p126
        %p283 = pneg %p123
        %p284 = pneg %p152
        %p285 = pneg %p149
        %p286 = scmp.lt.s32.totalorder %s19, 1
        %s287 = scalar_select %p286, %s19, 1
        %s288 = scalar_lea.vmem %s4, %s287
        %p289 = scmp.lt.s32.totalorder %s20, 1
        %s290 = scalar_select %p289, %s20, 1
        %s291 = smul.addr %s290, 8
        %s292 = scalar_lea.vmem %s0, %s291
        %p293 = scmp.lt.s32.totalorder %s20, 1
        %s294 = scalar_select %p293, %s20, 1
        %s295 = smul.addr %s294, 8
        %s296 = scalar_lea.vmem %s2, %s295
        %p297 = scmp.lt.s32.totalorder %s20, 1
        %s298 = scalar_select %p297, %s20, 1
        %s299 = smul.addr %s298, 8
        %s300 = scalar_lea.vmem %s3, %s299
        %p301 = scmp.lt.s32.totalorder %s19, 1
        %s302 = scalar_select %p301, %s19, 1
        %s303 = scalar_lea.vmem %s4, %s302
        %p304 = scmp.eq.s32.totalorder %s20, 0
        // Predicated region
        $region75: #{gradnorm_forward.3} parent=69 // pred_check
          %p305 = pneg %p304
        $region76: #{gradnorm_forward.3} parent=69 // pred_check_branch
          %307 = sbr.rel (%p305) target = $region78
        $region77: #{gradnorm_forward.3} parent=69 // pred_region
          %308 = vst [vmem:[#allocation2] sm:$0xff] 0.0
          %309 = vst [vmem:[#allocation2 + $0x8] sm:$0xff] 0.0
          %310 = vst [vmem:[#allocation2 + $0x10] sm:$0xff] 0.0
          %311 = vst [vmem:[#allocation2 + $0x18] sm:$0xff] 0.0
        $region78: #{gradnorm_forward.3} parent=69 // pred_fallthru
          _
        %v312 = vld [vmem:[%s292] sm:$0xff]
        %v313 = vld [vmem:[%s256] sm:$0xff]
        %v314 = vld [vmem:[%s256 + $0x8] sm:$0xff]
        %v315 = vld [vmem:[%s256 + $0x10] sm:$0xff]
        %v316 = vld [vmem:[%s256 + $0x18] sm:$0xff]
        %vm317 = vcmask 261120
        %v319 = vsel %vm317, %v312, 0
        %321 = vmatprep.subr.mxu0 0.0
        %322 = vmatpush1.msra.mxu0 0.0
        %323 = vmatprep.subr.mxu0 0.0
        %324 = vmatpush1.msra.mxu0 0.0
        %325 = vmatprep.subr.mxu0 0.0
        %326 = vmatpush1.msra.mxu0 0.0
        %327 = vmatprep.subr.mxu0 0.0
        %328 = vmatpush1.msra.mxu0 0.0
        %329 = vmatprep.subr.mxu0 0.0
        %330 = vmatpush1.msra.mxu0 0.0
        %331 = vmatprep.subr.mxu0 0.0
        %332 = vmatpush1.msra.mxu0 0.0
        %333 = vmatprep.subr.mxu0 0.0
        %334 = vmatpush1.msra.mxu0 0.0
        %335 = vmatprep.subr.mxu0 0.0
        %336 = vmatpush1.msra.mxu0 0.0
        %337 = vmatprep.subr.mxu0 0.0
        %338 = vmatpush1.msra.mxu0 0.0
        %339 = vmatprep.subr.mxu0 0.0
        %340 = vmatpush1.msra.mxu0 0.0
        %341 = vmatprep.subr.mxu0 0.0
        %342 = vmatpush1.msra.mxu0 0.0
        %343 = vmatprep.subr.mxu0 0.0
        %344 = vmatpush1.msra.mxu0 0.0
        %345 = vmatprep.subr.mxu0 0.0
        %346 = vmatpush1.msra.mxu0 %v316
        %347 = vmatprep.subr.mxu0 0.0
        %348 = vmatpush1.msra.mxu0 %v315
        %349 = vmatprep.subr.mxu0 0.0
        %350 = vmatpush1.msra.mxu0 %v314
        %351 = vmatprep.subr.mxu0 0.0
        %352 = vmatpush1.msra.mxu0 %v313
        %353 = vmatprep.subr.mxu0 0.0
        %354 = vmatpush2.msra.mxu0 0.0
        %355 = vmatprep.subr.mxu0 0.0
        %356 = vmatpush2.msra.mxu0 0.0
        %357 = vmatprep.subr.mxu0 0.0
        %358 = vmatpush2.msra.mxu0 0.0
        %359 = vmatprep.subr.mxu0 0.0
        %360 = vmatpush2.msra.mxu0 0.0
        %361 = vmatprep.subr.mxu0 0.0
        %362 = vmatpush2.msra.mxu0 0.0
        %363 = vmatprep.subr.mxu0 0.0
        %364 = vmatpush2.msra.mxu0 0.0
        %365 = vmatprep.subr.mxu0 0.0
        %366 = vmatpush2.msra.mxu0 0.0
        %367 = vmatprep.subr.mxu0 0.0
        %368 = vmatpush2.msra.mxu0 0.0
        %369 = vmatprep.subr.mxu0 0.0
        %370 = vmatpush2.msra.mxu0 0.0
        %371 = vmatprep.subr.mxu0 0.0
        %372 = vmatpush2.msra.mxu0 0.0
        %373 = vmatprep.subr.mxu0 0.0
        %374 = vmatpush2.msra.mxu0 0.0
        %375 = vmatprep.subr.mxu0 0.0
        %376 = vmatpush2.msra.mxu0 0.0
        %377 = vmatprep.subr.mxu0 0.0
        %378 = vmatpush2.msra.mxu0 0.0
        %379 = vmatprep.subr.mxu0 0.0
        %380 = vmatpush2.msra.mxu0 0.0
        %381 = vmatprep.subr.mxu0 0.0
        %382 = vmatpush2.msra.mxu0 0.0
        %383 = vmatprep.subr.mxu0 0.0
        %384 = vmatpush2.msra.mxu0 0.0
        %385 = vmatprep.mubr.f32.mxu0 0.0
        %386 = vmatmul.mubr.f32.gmra.mxu0 %v319
        %v387 = vpop.f32.mrf.mxu0
        %v388 = vadd.f32 0.0, %v387
        %v389 = vpop.f32.mrf.mxu0
        %390 = vdwg.mxu0
        %v391 = vlaneseq
        %v392 = vand.u32 %v391, 127
        %v393 = vld [vmem:[%s300] sm:$0xff]
        %395 = vset.pattern.permute.xlu0 0
        %396 = vperm.xlu0 %395, %v393
        %v397 = vpop.permute.xlu0 %396
        %v399 = vsub.f32 %v388, %v397
        %v400 = vmul.f32 %v399, 1.442695
        %v401 = vpow.pop %v400
        %v402 = vld [vmem:[%s296] sm:$0xff]
        %s403 = smul.u32 %s19, 128
        %v404 = vstv %s403
        %v405 = vsub.s32 %v402, %v404
        %406 = vset.pattern.permute.xlu0 0
        %407 = vperm.xlu0 %406, %v405
        %v408 = vpop.permute.xlu0 %407
        %vm409 = vcmp.eq.s32.totalorder %v392, %v408
        %v410 = vsel %vm409, 1, 0
        %v411 = vcvt.s32.f32 %v410
        %vm412 = vcmp.ne.s32.totalorder %v402, 0
        %v413 = vsel %vm412, 1, 0
        %v414 = vcvt.s32.f32 %v413
        %v415 = vsub.f32 %v401, %v411
        %417 = vset.pattern.permute.xlu0 0
        %418 = vperm.xlu0 %417, %v414
        %v419 = vpop.permute.xlu0 %418
        %v421 = vmul.f32 %v415, %v419
        %v422 = vld [vmem:[#allocation2] sm:$0xff]
        %v423 = vld [vmem:[#allocation2 + $0x8] sm:$0xff]
        %v424 = vld [vmem:[#allocation2 + $0x10] sm:$0xff]
        %v425 = vld [vmem:[#allocation2 + $0x18] sm:$0xff]
        %426 = vxpose.xlu0.b32.start [1/16] %v312, 128
        %427 = vxpose.xlu0.b32.cont [2/16] 0.0, 128
        %428 = vxpose.xlu0.b32.cont [3/16] 0.0, 128
        %429 = vxpose.xlu0.b32.cont [4/16] 0.0, 128
        %430 = vxpose.xlu0.b32.cont [5/16] 0.0, 128
        %431 = vxpose.xlu0.b32.cont [6/16] 0.0, 128
        %432 = vxpose.xlu0.b32.cont [7/16] 0.0, 128
        %433 = vxpose.xlu0.b32.cont [8/16] 0.0, 128
        %434 = vxpose.xlu0.b32.cont [9/16] 0.0, 128
        %435 = vxpose.xlu0.b32.cont [10/16] 0.0, 128
        %436 = vxpose.xlu0.b32.cont [11/16] 0.0, 128
        %437 = vxpose.xlu0.b32.cont [12/16] 0.0, 128
        %438 = vxpose.xlu0.b32.cont [13/16] 0.0, 128
        %439 = vxpose.xlu0.b32.cont [14/16] 0.0, 128
        %440 = vxpose.xlu0.b32.cont [15/16] 0.0, 128
        %441 = vxpose.xlu0.b32.end [16/16] 0.0, 128
        %v442 = vpop.trf.xlu0
        %v443 = vpop.trf.xlu0
        %v444 = vpop.trf.xlu0
        %v445 = vpop.trf.xlu0
        %v446 = vpop.trf.xlu0
        %v447 = vpop.trf.xlu0
        %v448 = vpop.trf.xlu0
        %v449 = vpop.trf.xlu0
        %v450 = vpop.trf.xlu0
        %v451 = vpop.trf.xlu0
        %v452 = vpop.trf.xlu0
        %v453 = vpop.trf.xlu0
        %v454 = vpop.trf.xlu0
        %v455 = vpop.trf.xlu0
        %v456 = vpop.trf.xlu0
        %v457 = vpop.trf.xlu0
        %vm458 = vcmask 64512
        %v460 = vsel %vm458, %v442, 0
        %v463 = vsel %vm458, %v443, 0
        %v466 = vsel %vm458, %v444, 0
        %v469 = vsel %vm458, %v445, 0
        %471 = vmatprep.subr.mxu0 0.0
        %472 = vmatpush1.msra.mxu0 0.0
        %473 = vmatprep.subr.mxu0 0.0
        %474 = vmatpush1.msra.mxu0 0.0
        %475 = vmatprep.subr.mxu0 0.0
        %476 = vmatpush1.msra.mxu0 0.0
        %477 = vmatprep.subr.mxu0 0.0
        %478 = vmatpush1.msra.mxu0 0.0
        %479 = vmatprep.subr.mxu0 0.0
        %480 = vmatpush1.msra.mxu0 0.0
        %481 = vmatprep.subr.mxu0 0.0
        %482 = vmatpush1.msra.mxu0 0.0
        %483 = vmatprep.subr.mxu0 0.0
        %484 = vmatpush1.msra.mxu0 0.0
        %485 = vmatprep.subr.mxu0 0.0
        %486 = vmatpush1.msra.mxu0 0.0
        %487 = vmatprep.subr.mxu0 0.0
        %488 = vmatpush1.msra.mxu0 0.0
        %489 = vmatprep.subr.mxu0 0.0
        %490 = vmatpush1.msra.mxu0 0.0
        %491 = vmatprep.subr.mxu0 0.0
        %492 = vmatpush1.msra.mxu0 0.0
        %493 = vmatprep.subr.mxu0 0.0
        %494 = vmatpush1.msra.mxu0 0.0
        %495 = vmatprep.subr.mxu0 0.0
        %496 = vmatpush1.msra.mxu0 0.0
        %497 = vmatprep.subr.mxu0 0.0
        %498 = vmatpush1.msra.mxu0 0.0
        %499 = vmatprep.subr.mxu0 0.0
        %500 = vmatpush1.msra.mxu0 0.0
        %501 = vmatprep.subr.mxu0 0.0
        %502 = vmatpush1.msra.mxu0 %v421
        %503 = vmatprep.subr.mxu0 0.0
        %504 = vmatpush2.msra.mxu0 0.0
        %505 = vmatprep.subr.mxu0 0.0
        %506 = vmatpush2.msra.mxu0 0.0
        %507 = vmatprep.subr.mxu0 0.0
        %508 = vmatpush2.msra.mxu0 0.0
        %509 = vmatprep.subr.mxu0 0.0
        %510 = vmatpush2.msra.mxu0 0.0
        %511 = vmatprep.subr.mxu0 0.0
        %512 = vmatpush2.msra.mxu0 0.0
        %513 = vmatprep.subr.mxu0 0.0
        %514 = vmatpush2.msra.mxu0 0.0
        %515 = vmatprep.subr.mxu0 0.0
        %516 = vmatpush2.msra.mxu0 0.0
        %517 = vmatprep.subr.mxu0 0.0
        %518 = vmatpush2.msra.mxu0 0.0
        %519 = vmatprep.subr.mxu0 0.0
        %520 = vmatpush2.msra.mxu0 0.0
        %521 = vmatprep.subr.mxu0 0.0
        %522 = vmatpush2.msra.mxu0 0.0
        %523 = vmatprep.subr.mxu0 0.0
        %524 = vmatpush2.msra.mxu0 0.0
        %525 = vmatprep.subr.mxu0 0.0
        %526 = vmatpush2.msra.mxu0 0.0
        %527 = vmatprep.subr.mxu0 0.0
        %528 = vmatpush2.msra.mxu0 0.0
        %529 = vmatprep.subr.mxu0 0.0
        %530 = vmatpush2.msra.mxu0 0.0
        %531 = vmatprep.subr.mxu0 0.0
        %532 = vmatpush2.msra.mxu0 0.0
        %533 = vmatprep.subr.mxu0 0.0
        %534 = vmatpush2.msra.mxu0 0.0
        %535 = vmatprep.mubr.f32.mxu0 0.0
        %536 = vmatmul.mubr.f32.gmra.mxu0 %v460
        %v537 = vpop.f32.mrf.mxu0
        %v538 = vadd.f32 0.0, %v537
        %v539 = vpop.f32.mrf.mxu0
        %540 = vmatprep.mubr.f32.mxu0 0.0
        %541 = vmatmul.mubr.f32.gmra.mxu0 %v463
        %v542 = vpop.f32.mrf.mxu0
        %v543 = vadd.f32 0.0, %v542
        %v544 = vpop.f32.mrf.mxu0
        %545 = vmatprep.mubr.f32.mxu0 0.0
        %546 = vmatmul.mubr.f32.gmra.mxu0 %v466
        %v547 = vpop.f32.mrf.mxu0
        %v548 = vadd.f32 0.0, %v547
        %v549 = vpop.f32.mrf.mxu0
        %550 = vmatprep.mubr.f32.mxu0 0.0
        %551 = vmatmul.mubr.f32.gmra.mxu0 %v469
        %v552 = vpop.f32.mrf.mxu0
        %v553 = vadd.f32 0.0, %v552
        %v554 = vpop.f32.mrf.mxu0
        %555 = vdwg.mxu0
        %v556 = vadd.f32 %v422, %v538
        %v557 = vadd.f32 %v423, %v543
        %v558 = vadd.f32 %v424, %v548
        %v559 = vadd.f32 %v425, %v553
        %560 = vst [vmem:[#allocation2] sm:$0xff] %v556
        %561 = vst [vmem:[#allocation2 + $0x8] sm:$0xff] %v557
        %562 = vst [vmem:[#allocation2 + $0x10] sm:$0xff] %v558
        %563 = vst [vmem:[#allocation2 + $0x18] sm:$0xff] %v559
        %p564 = scmp.eq.s32.totalorder %s20, 1
        // Predicated region
        $region79: #{gradnorm_forward.3} parent=69 // pred_check
          %p565 = pneg %p564
        $region80: #{gradnorm_forward.3} parent=69 // pred_check_branch
          %567 = sbr.rel (%p565) target = $region82
        $region81: #{gradnorm_forward.3} parent=69 // pred_region
          %v568 = vld [vmem:[#allocation2] sm:$0xff]
          %v569 = vld [vmem:[#allocation2 + $0x8] sm:$0xff]
          %v570 = vld [vmem:[#allocation2 + $0x10] sm:$0xff]
          %v571 = vld [vmem:[#allocation2 + $0x18] sm:$0xff]
          %v572 = vmul.f32 %v568, %v568
          %v573 = vmul.f32 %v569, %v569
          %v574 = vmul.f32 %v570, %v570
          %v575 = vmul.f32 %v571, %v571
          %v576 = vadd.f32 %v572, %v573
          %v577 = vadd.f32 %v576, %v574
          %v578 = vadd.f32 %v577, %v575
          %v579 = vrot.slane %v578, 4
          %v580 = vadd.f32 %v578, %v579
          %v581 = vrot.slane %v580, 2
          %v582 = vadd.f32 %v580, %v581
          %v583 = vrot.slane %v582, 1
          %v584 = vadd.f32 %v582, %v583
          %585 = vst [vmem:[%s303] sm:$0x1] %v584
        $region82: #{gradnorm_forward.3} parent=69 // pred_fallthru
          _
        %p586 = scmp.lt.s32.totalorder %s19, 1
        %s587 = scalar_select %p586, %s19, 1
        %s588 = scalar_lea.vmem %s4, %s587
        // Predicated region
        $region83: #{gradnorm_forward.3} parent=69 // pred_check
          %p589 = pneg %p149
        $region84: #{gradnorm_forward.3} parent=69 // pred_check_branch
          %591 = sbr.rel (%p589) target = $region86
        $region85: #{gradnorm_forward.3} parent=69 // pred_region
          _
        $region86: #{gradnorm_forward.3} parent=69 // pred_fallthru
          _
      $region70: #{gradnorm_forward.3} parent=5 // pred_fallthru
        _
      %p592 = scmp.le.s32.totalorder 2, %s10
      // Predicated region
      $region87: #{gradnorm_forward.3} parent=5 // pred_check
        %p593 = pneg %p592
      $region88: #{gradnorm_forward.3} parent=5 // pred_check_branch
        %595 = sbr.rel (%p593) target = $region90
      $region89: #{gradnorm_forward.3} parent=5 // pred_region
        %s596 = ssub.s32 %s10, 2
        // Predicated region
        $region91: #{gradnorm_forward.3} parent=89 // pred_check
          %p597 = pneg %p155
        $region92: #{gradnorm_forward.3} parent=89 // pred_check_branch
          %599 = sbr.rel (%p597) target = $region94
        $region93: #{gradnorm_forward.3} parent=89 // pred_region
          %p600 = scmp.lt.s32.totalorder %s21, 1
          %s601 = scalar_select %p600, %s21, 1
          %s602 = scalar_lea.vmem %s4, %s601
        $region94: #{gradnorm_forward.3} parent=89 // pred_fallthru
          _
      $region90: #{gradnorm_forward.3} parent=5 // pred_fallthru
        _
    $region6: #{gradnorm_forward.3} parent=1 // loop_footer
      %s14 = sadd.s32 1, %s10
    $region7: #{gradnorm_forward.3} parent=1 // loop_footer_branch
      %9 = sbr.rel target = $region3
    $region8: #{gradnorm_forward.3} parent=1 // loop_exit
      _

</llo_original>
